<compile_context>
chip_gen: v7x
topology: tpu7x:2x2x1
jax: 0.10.0
libtpu: 0.0.40
codegen_flags: <defaults>
</compile_context>

<pallas_src>
import math

import jax
import jax.numpy as jnp
from jax.experimental import pallas as pl
from jax.experimental.pallas import tpu as pltpu

# ----- config (small, consistent with the module) ---------------------------
B = 2           # batch
L = 8           # sequence length
D_MODEL = 32    # configs.d_model
D_FF = 64       # configs.d_ff
D_STATE = 16    # configs.d_state
DT_RANK = 4     # configs.dt_rank
EPS = 1e-5      # RMSNorm eps
DBCD = DT_RANK + 2 * D_STATE + D_FF   # x_proj output width (= 100)
XP_PAD = 128                          # x_proj width zero-padded to a full lane tile
N_TOK = B * L                         # tokens handled in the single fused call


# ----- kernel ----------------------------------------------------------------
def pmamba_kernel(x_ref, wn_ref, win_ref, bin_ref, wxp_ref, wdt_ref, bdt_ref,
                  alog_ref, wout_ref, bout_ref, o_ref, y_s):
    x = x_ref[...]                                            # (N_TOK, D_MODEL)

    # RMSNorm (per token)
    ms = jnp.mean(x * x, axis=-1, keepdims=True)
    xn = x * jax.lax.rsqrt(ms + EPS) * wn_ref[...]

    # in_proj -> split -> SiLU gates        (one (16,32)@(32,128) MXU matmul)
    xz = jnp.dot(xn, win_ref[...], preferred_element_type=jnp.float32) + bin_ref[...]
    xg = xz[:, :D_FF]
    z = xz[:, D_FF:]
    xg = xg * jax.nn.sigmoid(xg)                              # silu(x)
    z = z * jax.nn.sigmoid(z)                                 # silu(z)

    # x_proj (weight zero-padded to 128 lanes -> lane-aligned (16,128) result).
    dbcd = jnp.dot(xg, wxp_ref[...], preferred_element_type=jnp.float32)
    dlt = dbcd[:, :DT_RANK]
    Bm = dbcd[:, DT_RANK:DT_RANK + D_STATE]                   # (N_TOK, D_STATE)
    Cm = dbcd[:, DT_RANK + D_STATE:DT_RANK + 2 * D_STATE]     # (N_TOK, D_STATE)
    # The trailing "D" chunk (and zero pad) is never used in the module forward.

    # delta = softplus(dt_proj(delta))
    delta = jax.nn.softplus(
        jnp.dot(dlt, wdt_ref[...], preferred_element_type=jnp.float32) + bdt_ref[...])
    dxg = delta * xg                                          # (N_TOK, D_FF)

    # One-time relayouts so the per-step operands have states on sublanes.
    A_col = -jnp.exp(alog_ref[...])                           # (D_STATE, 1)
    BmT = Bm.T                                                # (D_STATE, N_TOK)
    CmT = Cm.T                                                # (D_STATE, N_TOK)

    # Fully unrolled selective scan; carry h[b] is (D_STATE, D_FF) = (16, 64) in
    # vregs, dA / BX are formed per step (never stored to VMEM).  At production
    # sizes (large L / d_ff) this scan would be tiled over L with a pipelined
    # grid; at these toy sizes everything fits in registers.
    h = [None] * B
    for t in range(L):
        for b in range(B):
            i = b * L + t
            bx = dxg[i:i + 1, :] * BmT[:, i:i + 1]            # (D_STATE, D_FF)
            if t == 0:
                h[b] = bx                                     # h_{-1} == 0
            else:
                dA = jnp.exp(delta[i:i + 1, :] * A_col)       # (D_STATE, D_FF)
                h[b] = dA * h[b] + bx
            # y_t = <h_t, C_t>: 16-sublane reduce -> lane-dense (1, D_FF) row.
            y_s[i:i + 1, :] = jnp.sum(h[b] * CmT[:, i:i + 1], axis=0, keepdims=True)

    y = y_s[...]                                              # (N_TOK, D_FF)

    # gate, out_proj, residual (residual uses the pre-norm x, as in PMambaBlock)
    out = jnp.dot(y * z, wout_ref[...], preferred_element_type=jnp.float32) + bout_ref[...]
    o_ref[...] = out + x


# ----- wrapper ---------------------------------------------------------------
def pmamba_block(x, params):
    wn, win, bin_, wxp_pad, wdt, bdt, alog_col, wout, bout = params
    x2 = x.reshape(N_TOK, D_MODEL)        # fuse batch: one invocation, one TC
    vmem = pl.BlockSpec(memory_space=pltpu.MemorySpace.VMEM)
    out = pl.pallas_call(
        pmamba_kernel,
        out_shape=jax.ShapeDtypeStruct((N_TOK, D_MODEL), jnp.float32),
        in_specs=[vmem] * 10,
        out_specs=vmem,
        scratch_shapes=[pltpu.VMEM((N_TOK, D_FF), jnp.float32)],   # y rows
    )(x2, wn, win, bin_, wxp_pad, wdt, bdt, alog_col, wout, bout)
    return out.reshape(B, L, D_MODEL)


# ----- pure-JAX reference (sanity check) --------------------------------------
def pmamba_ref(x, params):
    wn, win, bin_, wxp_pad, wdt, bdt, alog_col, wout, bout = params
    xn = x * jax.lax.rsqrt(jnp.mean(x * x, axis=-1, keepdims=True) + EPS) * wn[0]
    xz = xn @ win + bin_[0]
    xg, z = xz[..., :D_FF], xz[..., D_FF:]
    xg = jax.nn.silu(xg)
    z = jax.nn.silu(z)
    dbcd = xg @ wxp_pad
    dlt = dbcd[..., :DT_RANK]
    Bm = dbcd[..., DT_RANK:DT_RANK + D_STATE]
    Cm = dbcd[..., DT_RANK + D_STATE:DT_RANK + 2 * D_STATE]
    delta = jax.nn.softplus(dlt @ wdt + bdt[0])
    A = -jnp.exp(alog_col[:, 0])                              # (D_STATE,)
    dA = jnp.exp(delta[..., None] * A)                        # (B, L, D_FF, D_STATE)
    BX = (delta * xg)[..., None] * Bm[:, :, None, :]

    def step(h, inp):
        da_t, bx_t = inp
        h = da_t * h + bx_t
        return h, h

    def per_batch(da_b, bx_b):
        h0 = jnp.zeros((D_FF, D_STATE), jnp.float32)
        _, hs = jax.lax.scan(step, h0, (da_b, bx_b))
        return hs

    hs = jax.vmap(per_batch)(dA, BX)                          # (B, L, D_FF, D_STATE)
    y = jnp.einsum("blfs,bls->blf", hs, Cm)
    out = (y * z) @ wout + bout[0]
    return out + x


# ----- deterministic parameter init -------------------------------------------
def make_params():
    key = jax.random.PRNGKey(0)
    ks = jax.random.split(key, 8)
    wn = jnp.ones((1, D_MODEL), jnp.float32)                               # RMSNorm weight
    win = (jax.random.normal(ks[0], (D_MODEL, 2 * D_FF)) * 0.05).astype(jnp.float32)
    bin_ = (jax.random.normal(ks[1], (1, 2 * D_FF)) * 0.05).astype(jnp.float32)
    wxp = (jax.random.normal(ks[2], (D_FF, DBCD)) * 0.05).astype(jnp.float32)
    wxp_pad = jnp.zeros((D_FF, XP_PAD), jnp.float32).at[:, :DBCD].set(wxp)
    dt_scale, dt_min, dt_max, dt_floor = 1.0, 1e-3, 1e-1, 1e-4
    dt_init_std = DT_RANK ** (-0.5) * dt_scale
    wdt = jax.random.uniform(ks[3], (DT_RANK, D_FF),
                             minval=-dt_init_std, maxval=dt_init_std).astype(jnp.float32)
    u = jax.random.uniform(ks[4], (D_FF,))
    dt = jnp.clip(jnp.exp(u * (math.log(dt_max) - math.log(dt_min)) + math.log(dt_min)),
                  dt_floor, None)
    bdt = (dt + jnp.log(-jnp.expm1(-dt)))[None, :].astype(jnp.float32)     # inv_dt bias
    alog_col = jnp.log(jnp.arange(1, D_STATE + 1, dtype=jnp.float32))[:, None]  # (D_STATE, 1)
    wout = (jax.random.normal(ks[5], (D_FF, D_MODEL)) * 0.05).astype(jnp.float32)
    bout = (jax.random.normal(ks[6], (1, D_MODEL)) * 0.05).astype(jnp.float32)
    return (wn, win, bin_, wxp_pad, wdt, bdt, alog_col, wout, bout), ks[7]


if __name__ == "__main__":
    params, xkey = make_params()
    x = jax.random.normal(xkey, (B, L, D_MODEL), dtype=jnp.float32)

    out = jax.block_until_ready(pmamba_block(x, params))
    ref = jax.block_until_ready(pmamba_ref(x, params))

    assert out.shape == (B, L, D_MODEL)
    err = float(jnp.max(jnp.abs(out - ref)))
    assert jnp.allclose(out, ref, rtol=2e-2, atol=2e-2), "max abs err %g" % err

    print("KERNEL_OK")
</pallas_src>

<mosaic_0001>
module attributes {stable_mosaic.version = 11 : i64} {
  func.func @pmamba_kernel(%arg0: memref<16x32xf32, #tpu.memory_space<vmem>>, %arg1: memref<1x32xf32, #tpu.memory_space<vmem>>, %arg2: memref<32x128xf32, #tpu.memory_space<vmem>>, %arg3: memref<1x128xf32, #tpu.memory_space<vmem>>, %arg4: memref<64x128xf32, #tpu.memory_space<vmem>>, %arg5: memref<4x64xf32, #tpu.memory_space<vmem>>, %arg6: memref<1x64xf32, #tpu.memory_space<vmem>>, %arg7: memref<16x1xf32, #tpu.memory_space<vmem>>, %arg8: memref<64x32xf32, #tpu.memory_space<vmem>>, %arg9: memref<1x32xf32, #tpu.memory_space<vmem>>, %arg10: memref<16x32xf32, #tpu.memory_space<vmem>>, %arg11: memref<16x64xf32, #tpu.memory_space<vmem>>) attributes {dimension_semantics = [], scalar_prefetch = 0 : i64, scratch_operands = 1 : i64, tpu.core_type = #tpu.core_type<tc>} {
    %c0 = arith.constant 0 : index
    %c0_0 = arith.constant 0 : index
    %0 = vector.load %arg0[%c0, %c0_0] : memref<16x32xf32, #tpu.memory_space<vmem>>, vector<16x32xf32>
    %1 = arith.mulf %0, %0 : vector<16x32xf32>
    %cst = arith.constant dense<0.000000e+00> : vector<16xf32>
    %2 = vector.multi_reduction <add>, %1, %cst [1] : vector<16x32xf32> to vector<16xf32>
    %3 = vector.shape_cast %2 : vector<16xf32> to vector<16x1xf32>
    %cst_1 = arith.constant 3.200000e+01 : f32
    %4 = vector.broadcast %cst_1 : f32 to vector<16x1xf32>
    %5 = arith.divf %3, %4 : vector<16x1xf32>
    %cst_2 = arith.constant 9.99999974E-6 : f32
    %6 = vector.broadcast %cst_2 : f32 to vector<16x1xf32>
    %7 = arith.addf %5, %6 : vector<16x1xf32>
    %8 = math.rsqrt %7 : vector<16x1xf32>
    %9 = vector.broadcast %8 : vector<16x1xf32> to vector<16x32xf32>
    %10 = arith.mulf %0, %9 : vector<16x32xf32>
    %c0_3 = arith.constant 0 : index
    %c0_4 = arith.constant 0 : index
    %11 = vector.load %arg1[%c0_3, %c0_4] : memref<1x32xf32, #tpu.memory_space<vmem>>, vector<1x32xf32>
    %12 = vector.broadcast %11 : vector<1x32xf32> to vector<16x32xf32>
    %13 = arith.mulf %10, %12 : vector<16x32xf32>
    %c0_5 = arith.constant 0 : index
    %c0_6 = arith.constant 0 : index
    %14 = vector.load %arg2[%c0_5, %c0_6] : memref<32x128xf32, #tpu.memory_space<vmem>>, vector<32x128xf32>
    %cst_7 = arith.constant dense<0.000000e+00> : vector<16x128xf32>
    %15 = tpu.matmul %13, %14, %cst_7 {dimension_numbers = #tpu.dot_dimension_numbers<[1], [0], [0], [1], [0, 0, 1, 1], [], []>} : vector<16x32xf32>, vector<32x128xf32>, vector<16x128xf32> -> vector<16x128xf32>
    %c0_8 = arith.constant 0 : index
    %c0_9 = arith.constant 0 : index
    %16 = vector.load %arg3[%c0_8, %c0_9] : memref<1x128xf32, #tpu.memory_space<vmem>>, vector<1x128xf32>
    %17 = vector.broadcast %16 : vector<1x128xf32> to vector<16x128xf32>
    %18 = arith.addf %15, %17 : vector<16x128xf32>
    %19 = vector.extract_strided_slice %18 {offsets = [0, 0], sizes = [16, 64], strides = [1, 1]} : vector<16x128xf32> to vector<16x64xf32>
    %20 = vector.extract_strided_slice %18 {offsets = [0, 64], sizes = [16, 64], strides = [1, 1]} : vector<16x128xf32> to vector<16x64xf32>
    %21 = arith.negf %19 : vector<16x64xf32>
    %22 = math.exp %21 : vector<16x64xf32>
    %cst_10 = arith.constant 1.000000e+00 : f32
    %23 = vector.broadcast %cst_10 : f32 to vector<16x64xf32>
    %24 = arith.addf %23, %22 : vector<16x64xf32>
    %25 = arith.divf %23, %24 : vector<16x64xf32>
    %26 = arith.mulf %19, %25 : vector<16x64xf32>
    %27 = arith.negf %20 : vector<16x64xf32>
    %28 = math.exp %27 : vector<16x64xf32>
    %cst_11 = arith.constant 1.000000e+00 : f32
    %29 = vector.broadcast %cst_11 : f32 to vector<16x64xf32>
    %30 = arith.addf %29, %28 : vector<16x64xf32>
    %31 = arith.divf %29, %30 : vector<16x64xf32>
    %32 = arith.mulf %20, %31 : vector<16x64xf32>
    %c0_12 = arith.constant 0 : index
    %c0_13 = arith.constant 0 : index
    %33 = vector.load %arg4[%c0_12, %c0_13] : memref<64x128xf32, #tpu.memory_space<vmem>>, vector<64x128xf32>
    %cst_14 = arith.constant dense<0.000000e+00> : vector<16x128xf32>
    %34 = tpu.matmul %26, %33, %cst_14 {dimension_numbers = #tpu.dot_dimension_numbers<[1], [0], [0], [1], [0, 0, 1, 1], [], []>} : vector<16x64xf32>, vector<64x128xf32>, vector<16x128xf32> -> vector<16x128xf32>
    %35 = vector.extract_strided_slice %34 {offsets = [0, 0], sizes = [16, 4], strides = [1, 1]} : vector<16x128xf32> to vector<16x4xf32>
    %36 = vector.extract_strided_slice %34 {offsets = [0, 4], sizes = [16, 16], strides = [1, 1]} : vector<16x128xf32> to vector<16x16xf32>
    %37 = vector.extract_strided_slice %34 {offsets = [0, 20], sizes = [16, 16], strides = [1, 1]} : vector<16x128xf32> to vector<16x16xf32>
    %c0_15 = arith.constant 0 : index
    %c0_16 = arith.constant 0 : index
    %38 = vector.load %arg5[%c0_15, %c0_16] : memref<4x64xf32, #tpu.memory_space<vmem>>, vector<4x64xf32>
    %cst_17 = arith.constant dense<0.000000e+00> : vector<16x64xf32>
    %39 = tpu.matmul %35, %38, %cst_17 {dimension_numbers = #tpu.dot_dimension_numbers<[1], [0], [0], [1], [0, 0, 1, 1], [], []>} : vector<16x4xf32>, vector<4x64xf32>, vector<16x64xf32> -> vector<16x64xf32>
    %c0_18 = arith.constant 0 : index
    %c0_19 = arith.constant 0 : index
    %40 = vector.load %arg6[%c0_18, %c0_19] : memref<1x64xf32, #tpu.memory_space<vmem>>, vector<1x64xf32>
    %41 = vector.broadcast %40 : vector<1x64xf32> to vector<16x64xf32>
    %42 = arith.addf %39, %41 : vector<16x64xf32>
    %cst_20 = arith.constant 0.000000e+00 : f32
    %43 = vector.broadcast %cst_20 : f32 to vector<16x64xf32>
    %44 = arith.maximumf %42, %43 : vector<16x64xf32>
    %45 = vector.broadcast %cst_20 : f32 to vector<16x64xf32>
    %46 = arith.subf %42, %45 : vector<16x64xf32>
    %47 = arith.cmpf one, %46, %46 : vector<16x64xf32>
    %48 = vector.broadcast %cst_20 : f32 to vector<16x64xf32>
    %49 = arith.addf %42, %48 : vector<16x64xf32>
    %50 = math.absf %46 : vector<16x64xf32>
    %cst_21 = arith.constant 0.000000e+00 : f32
    %51 = vector.broadcast %cst_21 : f32 to vector<16x64xf32>
    %52 = arith.subf %51, %50 : vector<16x64xf32>
    %53 = math.exp %52 : vector<16x64xf32>
    %54 = math.log1p %53 : vector<16x64xf32>
    %55 = arith.addf %44, %54 : vector<16x64xf32>
    %56 = arith.select %47, %49, %55 : vector<16x64xi1>, vector<16x64xf32>
    %57 = arith.mulf %56, %26 : vector<16x64xf32>
    %c0_22 = arith.constant 0 : index
    %c0_23 = arith.constant 0 : index
    %58 = vector.load %arg7[%c0_22, %c0_23] : memref<16x1xf32, #tpu.memory_space<vmem>>, vector<16x1xf32>
    %59 = math.exp %58 : vector<16x1xf32>
    %cst_24 = arith.constant 0.000000e+00 : f32
    %60 = vector.broadcast %cst_24 : f32 to vector<16x1xf32>
    %61 = arith.subf %60, %59 : vector<16x1xf32>
    %62 = tpu.transpose %36, [1, 0] : vector<16x16xf32> -> vector<16x16xf32>
    %63 = tpu.transpose %37, [1, 0] : vector<16x16xf32> -> vector<16x16xf32>
    %64 = vector.extract_strided_slice %57 {offsets = [0, 0], sizes = [1, 64], strides = [1, 1]} : vector<16x64xf32> to vector<1x64xf32>
    %65 = vector.extract_strided_slice %62 {offsets = [0, 0], sizes = [16, 1], strides = [1, 1]} : vector<16x16xf32> to vector<16x1xf32>
    %66 = vector.broadcast %64 : vector<1x64xf32> to vector<16x64xf32>
    %67 = vector.broadcast %65 : vector<16x1xf32> to vector<16x64xf32>
    %68 = arith.mulf %66, %67 : vector<16x64xf32>
    %69 = vector.extract_strided_slice %63 {offsets = [0, 0], sizes = [16, 1], strides = [1, 1]} : vector<16x16xf32> to vector<16x1xf32>
    %70 = vector.broadcast %69 : vector<16x1xf32> to vector<16x64xf32>
    %71 = arith.mulf %68, %70 : vector<16x64xf32>
    %cst_25 = arith.constant dense<0.000000e+00> : vector<64xf32>
    %72 = vector.multi_reduction <add>, %71, %cst_25 [0] : vector<16x64xf32> to vector<64xf32>
    %73 = vector.shape_cast %72 : vector<64xf32> to vector<1x64xf32>
    %c0_26 = arith.constant 0 : index
    %c0_27 = arith.constant 0 : index
    %74 = vector.load %arg11[%c0_26, %c0_27] : memref<16x64xf32, #tpu.memory_space<vmem>>, vector<1x64xf32>
    tpu.vector_store %arg11[%c0_26, %c0_27], %73 {strides = array<i32>} : memref<16x64xf32, #tpu.memory_space<vmem>>, vector<1x64xf32>,
    %75 = vector.extract_strided_slice %57 {offsets = [8, 0], sizes = [1, 64], strides = [1, 1]} : vector<16x64xf32> to vector<1x64xf32>
    %76 = vector.extract_strided_slice %62 {offsets = [0, 8], sizes = [16, 1], strides = [1, 1]} : vector<16x16xf32> to vector<16x1xf32>
    %77 = vector.broadcast %75 : vector<1x64xf32> to vector<16x64xf32>
    %78 = vector.broadcast %76 : vector<16x1xf32> to vector<16x64xf32>
    %79 = arith.mulf %77, %78 : vector<16x64xf32>
    %80 = vector.extract_strided_slice %63 {offsets = [0, 8], sizes = [16, 1], strides = [1, 1]} : vector<16x16xf32> to vector<16x1xf32>
    %81 = vector.broadcast %80 : vector<16x1xf32> to vector<16x64xf32>
    %82 = arith.mulf %79, %81 : vector<16x64xf32>
    %cst_28 = arith.constant dense<0.000000e+00> : vector<64xf32>
    %83 = vector.multi_reduction <add>, %82, %cst_28 [0] : vector<16x64xf32> to vector<64xf32>
    %84 = vector.shape_cast %83 : vector<64xf32> to vector<1x64xf32>
    %c8 = arith.constant 8 : index
    %c0_29 = arith.constant 0 : index
    %85 = vector.load %arg11[%c8, %c0_29] : memref<16x64xf32, #tpu.memory_space<vmem>>, vector<1x64xf32>
    tpu.vector_store %arg11[%c8, %c0_29], %84 {strides = array<i32>} : memref<16x64xf32, #tpu.memory_space<vmem>>, vector<1x64xf32>,
    %86 = vector.extract_strided_slice %57 {offsets = [1, 0], sizes = [1, 64], strides = [1, 1]} : vector<16x64xf32> to vector<1x64xf32>
    %87 = vector.extract_strided_slice %62 {offsets = [0, 1], sizes = [16, 1], strides = [1, 1]} : vector<16x16xf32> to vector<16x1xf32>
    %88 = vector.broadcast %86 : vector<1x64xf32> to vector<16x64xf32>
    %89 = vector.broadcast %87 : vector<16x1xf32> to vector<16x64xf32>
    %90 = arith.mulf %88, %89 : vector<16x64xf32>
    %91 = vector.extract_strided_slice %56 {offsets = [1, 0], sizes = [1, 64], strides = [1, 1]} : vector<16x64xf32> to vector<1x64xf32>
    %92 = vector.broadcast %91 : vector<1x64xf32> to vector<16x64xf32>
    %93 = vector.broadcast %61 : vector<16x1xf32> to vector<16x64xf32>
    %94 = arith.mulf %92, %93 : vector<16x64xf32>
    %95 = math.exp %94 : vector<16x64xf32>
    %96 = arith.mulf %95, %68 : vector<16x64xf32>
    %97 = arith.addf %96, %90 : vector<16x64xf32>
    %98 = vector.extract_strided_slice %63 {offsets = [0, 1], sizes = [16, 1], strides = [1, 1]} : vector<16x16xf32> to vector<16x1xf32>
    %99 = vector.broadcast %98 : vector<16x1xf32> to vector<16x64xf32>
    %100 = arith.mulf %97, %99 : vector<16x64xf32>
    %cst_30 = arith.constant dense<0.000000e+00> : vector<64xf32>
    %101 = vector.multi_reduction <add>, %100, %cst_30 [0] : vector<16x64xf32> to vector<64xf32>
    %102 = vector.shape_cast %101 : vector<64xf32> to vector<1x64xf32>
    %c1 = arith.constant 1 : index
    %c0_31 = arith.constant 0 : index
    %103 = vector.load %arg11[%c1, %c0_31] : memref<16x64xf32, #tpu.memory_space<vmem>>, vector<1x64xf32>
    tpu.vector_store %arg11[%c1, %c0_31], %102 {strides = array<i32>} : memref<16x64xf32, #tpu.memory_space<vmem>>, vector<1x64xf32>,
    %104 = vector.extract_strided_slice %57 {offsets = [9, 0], sizes = [1, 64], strides = [1, 1]} : vector<16x64xf32> to vector<1x64xf32>
    %105 = vector.extract_strided_slice %62 {offsets = [0, 9], sizes = [16, 1], strides = [1, 1]} : vector<16x16xf32> to vector<16x1xf32>
    %106 = vector.broadcast %104 : vector<1x64xf32> to vector<16x64xf32>
    %107 = vector.broadcast %105 : vector<16x1xf32> to vector<16x64xf32>
    %108 = arith.mulf %106, %107 : vector<16x64xf32>
    %109 = vector.extract_strided_slice %56 {offsets = [9, 0], sizes = [1, 64], strides = [1, 1]} : vector<16x64xf32> to vector<1x64xf32>
    %110 = vector.broadcast %109 : vector<1x64xf32> to vector<16x64xf32>
    %111 = vector.broadcast %61 : vector<16x1xf32> to vector<16x64xf32>
    %112 = arith.mulf %110, %111 : vector<16x64xf32>
    %113 = math.exp %112 : vector<16x64xf32>
    %114 = arith.mulf %113, %79 : vector<16x64xf32>
    %115 = arith.addf %114, %108 : vector<16x64xf32>
    %116 = vector.extract_strided_slice %63 {offsets = [0, 9], sizes = [16, 1], strides = [1, 1]} : vector<16x16xf32> to vector<16x1xf32>
    %117 = vector.broadcast %116 : vector<16x1xf32> to vector<16x64xf32>
    %118 = arith.mulf %115, %117 : vector<16x64xf32>
    %cst_32 = arith.constant dense<0.000000e+00> : vector<64xf32>
    %119 = vector.multi_reduction <add>, %118, %cst_32 [0] : vector<16x64xf32> to vector<64xf32>
    %120 = vector.shape_cast %119 : vector<64xf32> to vector<1x64xf32>
    %c9 = arith.constant 9 : index
    %c0_33 = arith.constant 0 : index
    %121 = vector.load %arg11[%c9, %c0_33] : memref<16x64xf32, #tpu.memory_space<vmem>>, vector<1x64xf32>
    tpu.vector_store %arg11[%c9, %c0_33], %120 {strides = array<i32>} : memref<16x64xf32, #tpu.memory_space<vmem>>, vector<1x64xf32>,
    %122 = vector.extract_strided_slice %57 {offsets = [2, 0], sizes = [1, 64], strides = [1, 1]} : vector<16x64xf32> to vector<1x64xf32>
    %123 = vector.extract_strided_slice %62 {offsets = [0, 2], sizes = [16, 1], strides = [1, 1]} : vector<16x16xf32> to vector<16x1xf32>
    %124 = vector.broadcast %122 : vector<1x64xf32> to vector<16x64xf32>
    %125 = vector.broadcast %123 : vector<16x1xf32> to vector<16x64xf32>
    %126 = arith.mulf %124, %125 : vector<16x64xf32>
    %127 = vector.extract_strided_slice %56 {offsets = [2, 0], sizes = [1, 64], strides = [1, 1]} : vector<16x64xf32> to vector<1x64xf32>
    %128 = vector.broadcast %127 : vector<1x64xf32> to vector<16x64xf32>
    %129 = vector.broadcast %61 : vector<16x1xf32> to vector<16x64xf32>
    %130 = arith.mulf %128, %129 : vector<16x64xf32>
    %131 = math.exp %130 : vector<16x64xf32>
    %132 = arith.mulf %131, %97 : vector<16x64xf32>
    %133 = arith.addf %132, %126 : vector<16x64xf32>
    %134 = vector.extract_strided_slice %63 {offsets = [0, 2], sizes = [16, 1], strides = [1, 1]} : vector<16x16xf32> to vector<16x1xf32>
    %135 = vector.broadcast %134 : vector<16x1xf32> to vector<16x64xf32>
    %136 = arith.mulf %133, %135 : vector<16x64xf32>
    %cst_34 = arith.constant dense<0.000000e+00> : vector<64xf32>
    %137 = vector.multi_reduction <add>, %136, %cst_34 [0] : vector<16x64xf32> to vector<64xf32>
    %138 = vector.shape_cast %137 : vector<64xf32> to vector<1x64xf32>
    %c2 = arith.constant 2 : index
    %c0_35 = arith.constant 0 : index
    %139 = vector.load %arg11[%c2, %c0_35] : memref<16x64xf32, #tpu.memory_space<vmem>>, vector<1x64xf32>
    tpu.vector_store %arg11[%c2, %c0_35], %138 {strides = array<i32>} : memref<16x64xf32, #tpu.memory_space<vmem>>, vector<1x64xf32>,
    %140 = vector.extract_strided_slice %57 {offsets = [10, 0], sizes = [1, 64], strides = [1, 1]} : vector<16x64xf32> to vector<1x64xf32>
    %141 = vector.extract_strided_slice %62 {offsets = [0, 10], sizes = [16, 1], strides = [1, 1]} : vector<16x16xf32> to vector<16x1xf32>
    %142 = vector.broadcast %140 : vector<1x64xf32> to vector<16x64xf32>
    %143 = vector.broadcast %141 : vector<16x1xf32> to vector<16x64xf32>
    %144 = arith.mulf %142, %143 : vector<16x64xf32>
    %145 = vector.extract_strided_slice %56 {offsets = [10, 0], sizes = [1, 64], strides = [1, 1]} : vector<16x64xf32> to vector<1x64xf32>
    %146 = vector.broadcast %145 : vector<1x64xf32> to vector<16x64xf32>
    %147 = vector.broadcast %61 : vector<16x1xf32> to vector<16x64xf32>
    %148 = arith.mulf %146, %147 : vector<16x64xf32>
    %149 = math.exp %148 : vector<16x64xf32>
    %150 = arith.mulf %149, %115 : vector<16x64xf32>
    %151 = arith.addf %150, %144 : vector<16x64xf32>
    %152 = vector.extract_strided_slice %63 {offsets = [0, 10], sizes = [16, 1], strides = [1, 1]} : vector<16x16xf32> to vector<16x1xf32>
    %153 = vector.broadcast %152 : vector<16x1xf32> to vector<16x64xf32>
    %154 = arith.mulf %151, %153 : vector<16x64xf32>
    %cst_36 = arith.constant dense<0.000000e+00> : vector<64xf32>
    %155 = vector.multi_reduction <add>, %154, %cst_36 [0] : vector<16x64xf32> to vector<64xf32>
    %156 = vector.shape_cast %155 : vector<64xf32> to vector<1x64xf32>
    %c10 = arith.constant 10 : index
    %c0_37 = arith.constant 0 : index
    %157 = vector.load %arg11[%c10, %c0_37] : memref<16x64xf32, #tpu.memory_space<vmem>>, vector<1x64xf32>
    tpu.vector_store %arg11[%c10, %c0_37], %156 {strides = array<i32>} : memref<16x64xf32, #tpu.memory_space<vmem>>, vector<1x64xf32>,
    %158 = vector.extract_strided_slice %57 {offsets = [3, 0], sizes = [1, 64], strides = [1, 1]} : vector<16x64xf32> to vector<1x64xf32>
    %159 = vector.extract_strided_slice %62 {offsets = [0, 3], sizes = [16, 1], strides = [1, 1]} : vector<16x16xf32> to vector<16x1xf32>
    %160 = vector.broadcast %158 : vector<1x64xf32> to vector<16x64xf32>
    %161 = vector.broadcast %159 : vector<16x1xf32> to vector<16x64xf32>
    %162 = arith.mulf %160, %161 : vector<16x64xf32>
    %163 = vector.extract_strided_slice %56 {offsets = [3, 0], sizes = [1, 64], strides = [1, 1]} : vector<16x64xf32> to vector<1x64xf32>
    %164 = vector.broadcast %163 : vector<1x64xf32> to vector<16x64xf32>
    %165 = vector.broadcast %61 : vector<16x1xf32> to vector<16x64xf32>
    %166 = arith.mulf %164, %165 : vector<16x64xf32>
    %167 = math.exp %166 : vector<16x64xf32>
    %168 = arith.mulf %167, %133 : vector<16x64xf32>
    %169 = arith.addf %168, %162 : vector<16x64xf32>
    %170 = vector.extract_strided_slice %63 {offsets = [0, 3], sizes = [16, 1], strides = [1, 1]} : vector<16x16xf32> to vector<16x1xf32>
    %171 = vector.broadcast %170 : vector<16x1xf32> to vector<16x64xf32>
    %172 = arith.mulf %169, %171 : vector<16x64xf32>
    %cst_38 = arith.constant dense<0.000000e+00> : vector<64xf32>
    %173 = vector.multi_reduction <add>, %172, %cst_38 [0] : vector<16x64xf32> to vector<64xf32>
    %174 = vector.shape_cast %173 : vector<64xf32> to vector<1x64xf32>
    %c3 = arith.constant 3 : index
    %c0_39 = arith.constant 0 : index
    %175 = vector.load %arg11[%c3, %c0_39] : memref<16x64xf32, #tpu.memory_space<vmem>>, vector<1x64xf32>
    tpu.vector_store %arg11[%c3, %c0_39], %174 {strides = array<i32>} : memref<16x64xf32, #tpu.memory_space<vmem>>, vector<1x64xf32>,
    %176 = vector.extract_strided_slice %57 {offsets = [11, 0], sizes = [1, 64], strides = [1, 1]} : vector<16x64xf32> to vector<1x64xf32>
    %177 = vector.extract_strided_slice %62 {offsets = [0, 11], sizes = [16, 1], strides = [1, 1]} : vector<16x16xf32> to vector<16x1xf32>
    %178 = vector.broadcast %176 : vector<1x64xf32> to vector<16x64xf32>
    %179 = vector.broadcast %177 : vector<16x1xf32> to vector<16x64xf32>
    %180 = arith.mulf %178, %179 : vector<16x64xf32>
    %181 = vector.extract_strided_slice %56 {offsets = [11, 0], sizes = [1, 64], strides = [1, 1]} : vector<16x64xf32> to vector<1x64xf32>
    %182 = vector.broadcast %181 : vector<1x64xf32> to vector<16x64xf32>
    %183 = vector.broadcast %61 : vector<16x1xf32> to vector<16x64xf32>
    %184 = arith.mulf %182, %183 : vector<16x64xf32>
    %185 = math.exp %184 : vector<16x64xf32>
    %186 = arith.mulf %185, %151 : vector<16x64xf32>
    %187 = arith.addf %186, %180 : vector<16x64xf32>
    %188 = vector.extract_strided_slice %63 {offsets = [0, 11], sizes = [16, 1], strides = [1, 1]} : vector<16x16xf32> to vector<16x1xf32>
    %189 = vector.broadcast %188 : vector<16x1xf32> to vector<16x64xf32>
    %190 = arith.mulf %187, %189 : vector<16x64xf32>
    %cst_40 = arith.constant dense<0.000000e+00> : vector<64xf32>
    %191 = vector.multi_reduction <add>, %190, %cst_40 [0] : vector<16x64xf32> to vector<64xf32>
    %192 = vector.shape_cast %191 : vector<64xf32> to vector<1x64xf32>
    %c11 = arith.constant 11 : index
    %c0_41 = arith.constant 0 : index
    %193 = vector.load %arg11[%c11, %c0_41] : memref<16x64xf32, #tpu.memory_space<vmem>>, vector<1x64xf32>
    tpu.vector_store %arg11[%c11, %c0_41], %192 {strides = array<i32>} : memref<16x64xf32, #tpu.memory_space<vmem>>, vector<1x64xf32>,
    %194 = vector.extract_strided_slice %57 {offsets = [4, 0], sizes = [1, 64], strides = [1, 1]} : vector<16x64xf32> to vector<1x64xf32>
    %195 = vector.extract_strided_slice %62 {offsets = [0, 4], sizes = [16, 1], strides = [1, 1]} : vector<16x16xf32> to vector<16x1xf32>
    %196 = vector.broadcast %194 : vector<1x64xf32> to vector<16x64xf32>
    %197 = vector.broadcast %195 : vector<16x1xf32> to vector<16x64xf32>
    %198 = arith.mulf %196, %197 : vector<16x64xf32>
    %199 = vector.extract_strided_slice %56 {offsets = [4, 0], sizes = [1, 64], strides = [1, 1]} : vector<16x64xf32> to vector<1x64xf32>
    %200 = vector.broadcast %199 : vector<1x64xf32> to vector<16x64xf32>
    %201 = vector.broadcast %61 : vector<16x1xf32> to vector<16x64xf32>
    %202 = arith.mulf %200, %201 : vector<16x64xf32>
    %203 = math.exp %202 : vector<16x64xf32>
    %204 = arith.mulf %203, %169 : vector<16x64xf32>
    %205 = arith.addf %204, %198 : vector<16x64xf32>
    %206 = vector.extract_strided_slice %63 {offsets = [0, 4], sizes = [16, 1], strides = [1, 1]} : vector<16x16xf32> to vector<16x1xf32>
    %207 = vector.broadcast %206 : vector<16x1xf32> to vector<16x64xf32>
    %208 = arith.mulf %205, %207 : vector<16x64xf32>
    %cst_42 = arith.constant dense<0.000000e+00> : vector<64xf32>
    %209 = vector.multi_reduction <add>, %208, %cst_42 [0] : vector<16x64xf32> to vector<64xf32>
    %210 = vector.shape_cast %209 : vector<64xf32> to vector<1x64xf32>
    %c4 = arith.constant 4 : index
    %c0_43 = arith.constant 0 : index
    %211 = vector.load %arg11[%c4, %c0_43] : memref<16x64xf32, #tpu.memory_space<vmem>>, vector<1x64xf32>
    tpu.vector_store %arg11[%c4, %c0_43], %210 {strides = array<i32>} : memref<16x64xf32, #tpu.memory_space<vmem>>, vector<1x64xf32>,
    %212 = vector.extract_strided_slice %57 {offsets = [12, 0], sizes = [1, 64], strides = [1, 1]} : vector<16x64xf32> to vector<1x64xf32>
    %213 = vector.extract_strided_slice %62 {offsets = [0, 12], sizes = [16, 1], strides = [1, 1]} : vector<16x16xf32> to vector<16x1xf32>
    %214 = vector.broadcast %212 : vector<1x64xf32> to vector<16x64xf32>
    %215 = vector.broadcast %213 : vector<16x1xf32> to vector<16x64xf32>
    %216 = arith.mulf %214, %215 : vector<16x64xf32>
    %217 = vector.extract_strided_slice %56 {offsets = [12, 0], sizes = [1, 64], strides = [1, 1]} : vector<16x64xf32> to vector<1x64xf32>
    %218 = vector.broadcast %217 : vector<1x64xf32> to vector<16x64xf32>
    %219 = vector.broadcast %61 : vector<16x1xf32> to vector<16x64xf32>
    %220 = arith.mulf %218, %219 : vector<16x64xf32>
    %221 = math.exp %220 : vector<16x64xf32>
    %222 = arith.mulf %221, %187 : vector<16x64xf32>
    %223 = arith.addf %222, %216 : vector<16x64xf32>
    %224 = vector.extract_strided_slice %63 {offsets = [0, 12], sizes = [16, 1], strides = [1, 1]} : vector<16x16xf32> to vector<16x1xf32>
    %225 = vector.broadcast %224 : vector<16x1xf32> to vector<16x64xf32>
    %226 = arith.mulf %223, %225 : vector<16x64xf32>
    %cst_44 = arith.constant dense<0.000000e+00> : vector<64xf32>
    %227 = vector.multi_reduction <add>, %226, %cst_44 [0] : vector<16x64xf32> to vector<64xf32>
    %228 = vector.shape_cast %227 : vector<64xf32> to vector<1x64xf32>
    %c12 = arith.constant 12 : index
    %c0_45 = arith.constant 0 : index
    %229 = vector.load %arg11[%c12, %c0_45] : memref<16x64xf32, #tpu.memory_space<vmem>>, vector<1x64xf32>
    tpu.vector_store %arg11[%c12, %c0_45], %228 {strides = array<i32>} : memref<16x64xf32, #tpu.memory_space<vmem>>, vector<1x64xf32>,
    %230 = vector.extract_strided_slice %57 {offsets = [5, 0], sizes = [1, 64], strides = [1, 1]} : vector<16x64xf32> to vector<1x64xf32>
    %231 = vector.extract_strided_slice %62 {offsets = [0, 5], sizes = [16, 1], strides = [1, 1]} : vector<16x16xf32> to vector<16x1xf32>
    %232 = vector.broadcast %230 : vector<1x64xf32> to vector<16x64xf32>
    %233 = vector.broadcast %231 : vector<16x1xf32> to vector<16x64xf32>
    %234 = arith.mulf %232, %233 : vector<16x64xf32>
    %235 = vector.extract_strided_slice %56 {offsets = [5, 0], sizes = [1, 64], strides = [1, 1]} : vector<16x64xf32> to vector<1x64xf32>
    %236 = vector.broadcast %235 : vector<1x64xf32> to vector<16x64xf32>
    %237 = vector.broadcast %61 : vector<16x1xf32> to vector<16x64xf32>
    %238 = arith.mulf %236, %237 : vector<16x64xf32>
    %239 = math.exp %238 : vector<16x64xf32>
    %240 = arith.mulf %239, %205 : vector<16x64xf32>
    %241 = arith.addf %240, %234 : vector<16x64xf32>
    %242 = vector.extract_strided_slice %63 {offsets = [0, 5], sizes = [16, 1], strides = [1, 1]} : vector<16x16xf32> to vector<16x1xf32>
    %243 = vector.broadcast %242 : vector<16x1xf32> to vector<16x64xf32>
    %244 = arith.mulf %241, %243 : vector<16x64xf32>
    %cst_46 = arith.constant dense<0.000000e+00> : vector<64xf32>
    %245 = vector.multi_reduction <add>, %244, %cst_46 [0] : vector<16x64xf32> to vector<64xf32>
    %246 = vector.shape_cast %245 : vector<64xf32> to vector<1x64xf32>
    %c5 = arith.constant 5 : index
    %c0_47 = arith.constant 0 : index
    %247 = vector.load %arg11[%c5, %c0_47] : memref<16x64xf32, #tpu.memory_space<vmem>>, vector<1x64xf32>
    tpu.vector_store %arg11[%c5, %c0_47], %246 {strides = array<i32>} : memref<16x64xf32, #tpu.memory_space<vmem>>, vector<1x64xf32>,
    %248 = vector.extract_strided_slice %57 {offsets = [13, 0], sizes = [1, 64], strides = [1, 1]} : vector<16x64xf32> to vector<1x64xf32>
    %249 = vector.extract_strided_slice %62 {offsets = [0, 13], sizes = [16, 1], strides = [1, 1]} : vector<16x16xf32> to vector<16x1xf32>
    %250 = vector.broadcast %248 : vector<1x64xf32> to vector<16x64xf32>
    %251 = vector.broadcast %249 : vector<16x1xf32> to vector<16x64xf32>
    %252 = arith.mulf %250, %251 : vector<16x64xf32>
    %253 = vector.extract_strided_slice %56 {offsets = [13, 0], sizes = [1, 64], strides = [1, 1]} : vector<16x64xf32> to vector<1x64xf32>
    %254 = vector.broadcast %253 : vector<1x64xf32> to vector<16x64xf32>
    %255 = vector.broadcast %61 : vector<16x1xf32> to vector<16x64xf32>
    %256 = arith.mulf %254, %255 : vector<16x64xf32>
    %257 = math.exp %256 : vector<16x64xf32>
    %258 = arith.mulf %257, %223 : vector<16x64xf32>
    %259 = arith.addf %258, %252 : vector<16x64xf32>
    %260 = vector.extract_strided_slice %63 {offsets = [0, 13], sizes = [16, 1], strides = [1, 1]} : vector<16x16xf32> to vector<16x1xf32>
    %261 = vector.broadcast %260 : vector<16x1xf32> to vector<16x64xf32>
    %262 = arith.mulf %259, %261 : vector<16x64xf32>
    %cst_48 = arith.constant dense<0.000000e+00> : vector<64xf32>
    %263 = vector.multi_reduction <add>, %262, %cst_48 [0] : vector<16x64xf32> to vector<64xf32>
    %264 = vector.shape_cast %263 : vector<64xf32> to vector<1x64xf32>
    %c13 = arith.constant 13 : index
    %c0_49 = arith.constant 0 : index
    %265 = vector.load %arg11[%c13, %c0_49] : memref<16x64xf32, #tpu.memory_space<vmem>>, vector<1x64xf32>
    tpu.vector_store %arg11[%c13, %c0_49], %264 {strides = array<i32>} : memref<16x64xf32, #tpu.memory_space<vmem>>, vector<1x64xf32>,
    %266 = vector.extract_strided_slice %57 {offsets = [6, 0], sizes = [1, 64], strides = [1, 1]} : vector<16x64xf32> to vector<1x64xf32>
    %267 = vector.extract_strided_slice %62 {offsets = [0, 6], sizes = [16, 1], strides = [1, 1]} : vector<16x16xf32> to vector<16x1xf32>
    %268 = vector.broadcast %266 : vector<1x64xf32> to vector<16x64xf32>
    %269 = vector.broadcast %267 : vector<16x1xf32> to vector<16x64xf32>
    %270 = arith.mulf %268, %269 : vector<16x64xf32>
    %271 = vector.extract_strided_slice %56 {offsets = [6, 0], sizes = [1, 64], strides = [1, 1]} : vector<16x64xf32> to vector<1x64xf32>
    %272 = vector.broadcast %271 : vector<1x64xf32> to vector<16x64xf32>
    %273 = vector.broadcast %61 : vector<16x1xf32> to vector<16x64xf32>
    %274 = arith.mulf %272, %273 : vector<16x64xf32>
    %275 = math.exp %274 : vector<16x64xf32>
    %276 = arith.mulf %275, %241 : vector<16x64xf32>
    %277 = arith.addf %276, %270 : vector<16x64xf32>
    %278 = vector.extract_strided_slice %63 {offsets = [0, 6], sizes = [16, 1], strides = [1, 1]} : vector<16x16xf32> to vector<16x1xf32>
    %279 = vector.broadcast %278 : vector<16x1xf32> to vector<16x64xf32>
    %280 = arith.mulf %277, %279 : vector<16x64xf32>
    %cst_50 = arith.constant dense<0.000000e+00> : vector<64xf32>
    %281 = vector.multi_reduction <add>, %280, %cst_50 [0] : vector<16x64xf32> to vector<64xf32>
    %282 = vector.shape_cast %281 : vector<64xf32> to vector<1x64xf32>
    %c6 = arith.constant 6 : index
    %c0_51 = arith.constant 0 : index
    %283 = vector.load %arg11[%c6, %c0_51] : memref<16x64xf32, #tpu.memory_space<vmem>>, vector<1x64xf32>
    tpu.vector_store %arg11[%c6, %c0_51], %282 {strides = array<i32>} : memref<16x64xf32, #tpu.memory_space<vmem>>, vector<1x64xf32>,
    %284 = vector.extract_strided_slice %57 {offsets = [14, 0], sizes = [1, 64], strides = [1, 1]} : vector<16x64xf32> to vector<1x64xf32>
    %285 = vector.extract_strided_slice %62 {offsets = [0, 14], sizes = [16, 1], strides = [1, 1]} : vector<16x16xf32> to vector<16x1xf32>
    %286 = vector.broadcast %284 : vector<1x64xf32> to vector<16x64xf32>
    %287 = vector.broadcast %285 : vector<16x1xf32> to vector<16x64xf32>
    %288 = arith.mulf %286, %287 : vector<16x64xf32>
    %289 = vector.extract_strided_slice %56 {offsets = [14, 0], sizes = [1, 64], strides = [1, 1]} : vector<16x64xf32> to vector<1x64xf32>
    %290 = vector.broadcast %289 : vector<1x64xf32> to vector<16x64xf32>
    %291 = vector.broadcast %61 : vector<16x1xf32> to vector<16x64xf32>
    %292 = arith.mulf %290, %291 : vector<16x64xf32>
    %293 = math.exp %292 : vector<16x64xf32>
    %294 = arith.mulf %293, %259 : vector<16x64xf32>
    %295 = arith.addf %294, %288 : vector<16x64xf32>
    %296 = vector.extract_strided_slice %63 {offsets = [0, 14], sizes = [16, 1], strides = [1, 1]} : vector<16x16xf32> to vector<16x1xf32>
    %297 = vector.broadcast %296 : vector<16x1xf32> to vector<16x64xf32>
    %298 = arith.mulf %295, %297 : vector<16x64xf32>
    %cst_52 = arith.constant dense<0.000000e+00> : vector<64xf32>
    %299 = vector.multi_reduction <add>, %298, %cst_52 [0] : vector<16x64xf32> to vector<64xf32>
    %300 = vector.shape_cast %299 : vector<64xf32> to vector<1x64xf32>
    %c14 = arith.constant 14 : index
    %c0_53 = arith.constant 0 : index
    %301 = vector.load %arg11[%c14, %c0_53] : memref<16x64xf32, #tpu.memory_space<vmem>>, vector<1x64xf32>
    tpu.vector_store %arg11[%c14, %c0_53], %300 {strides = array<i32>} : memref<16x64xf32, #tpu.memory_space<vmem>>, vector<1x64xf32>,
    %302 = vector.extract_strided_slice %57 {offsets = [7, 0], sizes = [1, 64], strides = [1, 1]} : vector<16x64xf32> to vector<1x64xf32>
    %303 = vector.extract_strided_slice %62 {offsets = [0, 7], sizes = [16, 1], strides = [1, 1]} : vector<16x16xf32> to vector<16x1xf32>
    %304 = vector.broadcast %302 : vector<1x64xf32> to vector<16x64xf32>
    %305 = vector.broadcast %303 : vector<16x1xf32> to vector<16x64xf32>
    %306 = arith.mulf %304, %305 : vector<16x64xf32>
    %307 = vector.extract_strided_slice %56 {offsets = [7, 0], sizes = [1, 64], strides = [1, 1]} : vector<16x64xf32> to vector<1x64xf32>
    %308 = vector.broadcast %307 : vector<1x64xf32> to vector<16x64xf32>
    %309 = vector.broadcast %61 : vector<16x1xf32> to vector<16x64xf32>
    %310 = arith.mulf %308, %309 : vector<16x64xf32>
    %311 = math.exp %310 : vector<16x64xf32>
    %312 = arith.mulf %311, %277 : vector<16x64xf32>
    %313 = arith.addf %312, %306 : vector<16x64xf32>
    %314 = vector.extract_strided_slice %63 {offsets = [0, 7], sizes = [16, 1], strides = [1, 1]} : vector<16x16xf32> to vector<16x1xf32>
    %315 = vector.broadcast %314 : vector<16x1xf32> to vector<16x64xf32>
    %316 = arith.mulf %313, %315 : vector<16x64xf32>
    %cst_54 = arith.constant dense<0.000000e+00> : vector<64xf32>
    %317 = vector.multi_reduction <add>, %316, %cst_54 [0] : vector<16x64xf32> to vector<64xf32>
    %318 = vector.shape_cast %317 : vector<64xf32> to vector<1x64xf32>
    %c7 = arith.constant 7 : index
    %c0_55 = arith.constant 0 : index
    %319 = vector.load %arg11[%c7, %c0_55] : memref<16x64xf32, #tpu.memory_space<vmem>>, vector<1x64xf32>
    tpu.vector_store %arg11[%c7, %c0_55], %318 {strides = array<i32>} : memref<16x64xf32, #tpu.memory_space<vmem>>, vector<1x64xf32>,
    %320 = vector.extract_strided_slice %57 {offsets = [15, 0], sizes = [1, 64], strides = [1, 1]} : vector<16x64xf32> to vector<1x64xf32>
    %321 = vector.extract_strided_slice %62 {offsets = [0, 15], sizes = [16, 1], strides = [1, 1]} : vector<16x16xf32> to vector<16x1xf32>
    %322 = vector.broadcast %320 : vector<1x64xf32> to vector<16x64xf32>
    %323 = vector.broadcast %321 : vector<16x1xf32> to vector<16x64xf32>
    %324 = arith.mulf %322, %323 : vector<16x64xf32>
    %325 = vector.extract_strided_slice %56 {offsets = [15, 0], sizes = [1, 64], strides = [1, 1]} : vector<16x64xf32> to vector<1x64xf32>
    %326 = vector.broadcast %325 : vector<1x64xf32> to vector<16x64xf32>
    %327 = vector.broadcast %61 : vector<16x1xf32> to vector<16x64xf32>
    %328 = arith.mulf %326, %327 : vector<16x64xf32>
    %329 = math.exp %328 : vector<16x64xf32>
    %330 = arith.mulf %329, %295 : vector<16x64xf32>
    %331 = arith.addf %330, %324 : vector<16x64xf32>
    %332 = vector.extract_strided_slice %63 {offsets = [0, 15], sizes = [16, 1], strides = [1, 1]} : vector<16x16xf32> to vector<16x1xf32>
    %333 = vector.broadcast %332 : vector<16x1xf32> to vector<16x64xf32>
    %334 = arith.mulf %331, %333 : vector<16x64xf32>
    %cst_56 = arith.constant dense<0.000000e+00> : vector<64xf32>
    %335 = vector.multi_reduction <add>, %334, %cst_56 [0] : vector<16x64xf32> to vector<64xf32>
    %336 = vector.shape_cast %335 : vector<64xf32> to vector<1x64xf32>
    %c15 = arith.constant 15 : index
    %c0_57 = arith.constant 0 : index
    %337 = vector.load %arg11[%c15, %c0_57] : memref<16x64xf32, #tpu.memory_space<vmem>>, vector<1x64xf32>
    tpu.vector_store %arg11[%c15, %c0_57], %336 {strides = array<i32>} : memref<16x64xf32, #tpu.memory_space<vmem>>, vector<1x64xf32>,
    %c0_58 = arith.constant 0 : index
    %c0_59 = arith.constant 0 : index
    %338 = vector.load %arg11[%c0_58, %c0_59] : memref<16x64xf32, #tpu.memory_space<vmem>>, vector<16x64xf32>
    %339 = arith.mulf %338, %32 : vector<16x64xf32>
    %c0_60 = arith.constant 0 : index
    %c0_61 = arith.constant 0 : index
    %340 = vector.load %arg8[%c0_60, %c0_61] : memref<64x32xf32, #tpu.memory_space<vmem>>, vector<64x32xf32>
    %cst_62 = arith.constant dense<0.000000e+00> : vector<16x32xf32>
    %341 = tpu.matmul %339, %340, %cst_62 {dimension_numbers = #tpu.dot_dimension_numbers<[1], [0], [0], [1], [0, 0, 1, 1], [], []>} : vector<16x64xf32>, vector<64x32xf32>, vector<16x32xf32> -> vector<16x32xf32>
    %c0_63 = arith.constant 0 : index
    %c0_64 = arith.constant 0 : index
    %342 = vector.load %arg9[%c0_63, %c0_64] : memref<1x32xf32, #tpu.memory_space<vmem>>, vector<1x32xf32>
    %343 = vector.broadcast %342 : vector<1x32xf32> to vector<16x32xf32>
    %344 = arith.addf %341, %343 : vector<16x32xf32>
    %345 = arith.addf %344, %0 : vector<16x32xf32>
    %c0_65 = arith.constant 0 : index
    %c0_66 = arith.constant 0 : index
    %346 = vector.load %arg10[%c0_65, %c0_66] : memref<16x32xf32, #tpu.memory_space<vmem>>, vector<16x32xf32>
    tpu.vector_store %arg10[%c0_65, %c0_66], %345 {strides = array<i32>} : memref<16x32xf32, #tpu.memory_space<vmem>>, vector<16x32xf32>,
    return
  }
}

</mosaic_0001>

<llo_original>
// kernel: tpu_custom_call.1
$region0: #{tpu_custom_call.1}
  #allocation0 [shape = 'u32[]', space=smem, size = 0x4, offset = 0x4, fixed_abs, tag = 'smem constant byte address 0x4 - core index']
  #allocation1 [shape = 'u32[144,128]{1,0:T(1,128)}', space=vmem, size = 0x12000, scoped, tag = 'internal scratch']
  #allocation2 [shape = 'f32[16,64]{1,0:T(8,128)}', space=vmem, size = 0x2000, scoped, tag = 'scratch operand']
  %s0 = inlined_call_operand.hbm [shape: f32[16,32], index: 0, kind: input, shape index: {}]
  %s1 = inlined_call_operand.vmem [shape: f32[1,32], index: 1, kind: input, shape index: {}]
  %s2 = inlined_call_operand.vmem [shape: f32[32,128], index: 2, kind: input, shape index: {}]
  %s3 = inlined_call_operand.vmem [shape: f32[1,128], index: 3, kind: input, shape index: {}]
  %s4 = inlined_call_operand.vmem [shape: f32[64,128], index: 4, kind: input, shape index: {}]
  %s5 = inlined_call_operand.vmem [shape: f32[4,64], index: 5, kind: input, shape index: {}]
  %s6 = inlined_call_operand.vmem [shape: f32[1,64], index: 6, kind: input, shape index: {}]
  %s7 = inlined_call_operand.vmem [shape: f32[16,1], index: 7, kind: input, shape index: {}]
  %s8 = inlined_call_operand.vmem [shape: f32[64,32], index: 8, kind: input, shape index: {}]
  %s9 = inlined_call_operand.vmem [shape: f32[1,32], index: 9, kind: input, shape index: {}]
  %s10 = inlined_call_operand.hbm [shape: f32[16,32], index: 10, kind: output, shape index: {}]
  %s11 = sld [smem:[#allocation0]]
  $region54: #{tpu_custom_call.1} parent=0
    _
  %s13 = ssub.s32 1, %s11
  %s14 = scalar_select 0, %s13, %s11
  $region1: #{tpu_custom_call.1} parent=0
    #allocation3 [shape = 'u8[8192]{0}', space=vmem, size = 0x2000, scoped, tag = 'input window, operand 0, single buffered']
    #allocation4 [shape = 's32[1]{0}', space=sflag, size = 0x4, scoped, tag = 'scoped memory for tpu_custom_call.1']
    #allocation5 [shape = 's32[1]{0}', space=sflag, size = 0x4, scoped, tag = 'scoped memory for tpu_custom_call.1']
    #allocation6 [shape = 'u8[8192]{0}', space=vmem, size = 0x2000, scoped, tag = 'output window, operand 0, single buffered']
    %15 = vsyncpa [#allocation4], 0
    %16 = vsyncpa [#allocation5], 0
    // Predicated region
    $region2: #{tpu_custom_call.1} parent=1 // pred_check
      _
    $region3: #{tpu_custom_call.1} parent=1 // pred_check_branch
      %18 = sbr.rel (0) target = $region5
    $region4: #{tpu_custom_call.1} parent=1 // pred_region
      %s20 = ssub.s32 256, 256
      %21 = vsyncadd [#allocation4], %s20
      %s22 = sshll.u32 [#allocation3], 4
      %s23 = int_to_ptr.vmem [resolvable:$true] %s22
      %28 = dma.hbm_to_vmem [thread:$0]  %s0, 256, %s23, [#allocation4], 128, 128, 8
    $region5: #{tpu_custom_call.1} parent=1 // pred_fallthru
      _
    // Predicated region
    $region6: #{tpu_custom_call.1} parent=1 // pred_check
      _
    $region7: #{tpu_custom_call.1} parent=1 // pred_check_branch
      %30 = sbr.rel (0) target = $region9
    $region8: #{tpu_custom_call.1} parent=1 // pred_region
      _
    $region9: #{tpu_custom_call.1} parent=1 // pred_fallthru
      _
    // Predicated region
    $region10: #{tpu_custom_call.1} parent=1 // pred_check
      _
    $region11: #{tpu_custom_call.1} parent=1 // pred_check_branch
      %32 = sbr.rel (0) target = $region13
    $region12: #{tpu_custom_call.1} parent=1 // pred_region
      _
    $region13: #{tpu_custom_call.1} parent=1 // pred_fallthru
      _
    // Predicated region
    $region14: #{tpu_custom_call.1} parent=1 // pred_check
      _
    $region15: #{tpu_custom_call.1} parent=1 // pred_check_branch
      %34 = sbr.rel (0) target = $region17
    $region16: #{tpu_custom_call.1} parent=1 // pred_region
      _
    $region17: #{tpu_custom_call.1} parent=1 // pred_fallthru
      _
    // Predicated region
    $region18: #{tpu_custom_call.1} parent=1 // pred_check
      _
    $region19: #{tpu_custom_call.1} parent=1 // pred_check_branch
      %36 = sbr.rel (0) target = $region21
    $region20: #{tpu_custom_call.1} parent=1 // pred_region
      _
    $region21: #{tpu_custom_call.1} parent=1 // pred_fallthru
      _
    // Predicated region
    $region22: #{tpu_custom_call.1} parent=1 // pred_check
      _
    $region23: #{tpu_custom_call.1} parent=1 // pred_check_branch
      %38 = sbr.rel (0) target = $region25
    $region24: #{tpu_custom_call.1} parent=1 // pred_region
      _
    $region25: #{tpu_custom_call.1} parent=1 // pred_fallthru
      _
    // Predicated region
    $region26: #{tpu_custom_call.1} parent=1 // pred_check
      _
    $region27: #{tpu_custom_call.1} parent=1 // pred_check_branch
      %40 = sbr.rel (0) target = $region29
    $region28: #{tpu_custom_call.1} parent=1 // pred_region
      _
    $region29: #{tpu_custom_call.1} parent=1 // pred_fallthru
      _
    // Predicated region
    $region30: #{tpu_custom_call.1} parent=1 // pred_check
      _
    $region31: #{tpu_custom_call.1} parent=1 // pred_check_branch
      %42 = sbr.rel (0) target = $region33
    $region32: #{tpu_custom_call.1} parent=1 // pred_region
      _
    $region33: #{tpu_custom_call.1} parent=1 // pred_fallthru
      _
    // Predicated region
    $region34: #{tpu_custom_call.1} parent=1 // pred_check
      _
    $region35: #{tpu_custom_call.1} parent=1 // pred_check_branch
      %44 = sbr.rel (0) target = $region37
    $region36: #{tpu_custom_call.1} parent=1 // pred_region
      _
    $region37: #{tpu_custom_call.1} parent=1 // pred_fallthru
      _
    // Predicated region
    $region38: #{tpu_custom_call.1} parent=1 // pred_check
      _
    $region39: #{tpu_custom_call.1} parent=1 // pred_check_branch
      %46 = sbr.rel (0) target = $region41
    $region40: #{tpu_custom_call.1} parent=1 // pred_region
      _
    $region41: #{tpu_custom_call.1} parent=1 // pred_fallthru
      _
    // Predicated region
    $region42: #{tpu_custom_call.1} parent=1 // pred_check
      _
    $region43: #{tpu_custom_call.1} parent=1 // pred_check_branch
      %48 = sbr.rel (0) target = $region45
    $region44: #{tpu_custom_call.1} parent=1 // pred_region
      %49 = dma.done [#allocation4], 256
    $region45: #{tpu_custom_call.1} parent=1 // pred_fallthru
      _
    %v50 = vld [vmem:[#allocation3] sm:$0xff]
    %v51 = vld [vmem:[#allocation3 + $0x8] sm:$0xff]
    %v52 = vmul.f32 %v50, %v50
    %v53 = vmul.f32 %v51, %v51
    %vm54 = vcmask 261120
    %v55 = vsel %vm54, %v52, 0.0
    %56 = vadd.xlane.f32.xlu0 %v55
    %v57 = vpop.xlane.xlu0 %56
    %v58 = vsel %vm54, %v53, 0.0
    %59 = vadd.xlane.f32.xlu0 %v58
    %v60 = vpop.xlane.xlu0 %59
    %v61 = vrcp.pop 32.0
    %v62 = vmul.f32 %v57, %v61
    %v63 = vmul.f32 %v60, %v61
    %v64 = vadd.f32 %v62, 1e-05
    %v65 = vadd.f32 %v63, 1e-05
    %v66 = vrsqrt.pop %v64
    %v67 = vrsqrt.pop %v65
    %v68 = vmul.f32 %v50, %v66
    %v69 = vmul.f32 %v51, %v67
    %v70 = vld [vmem:[%s1] sm:$0x1]
    %v72 = vlaneseq
    %v73 = vshrl.u32 %v72, 7
    %v74 = vsub.s32 0, %v73
    %v75 = vrot.slane %v70, %v74
    %v77 = vmul.f32 %v68, %v75
    %v78 = vmul.f32 %v69, %v75
    %v79 = vld [vmem:[%s2] sm:$0xff]
    %v80 = vld [vmem:[%s2 + $0x8] sm:$0xff]
    %v81 = vld [vmem:[%s2 + $0x10] sm:$0xff]
    %v82 = vld [vmem:[%s2 + $0x18] sm:$0xff]
    %v83 = vld [vmem:[%s3] sm:$0x1]
    %v85 = vlaneseq
    %v86 = vshrl.u32 %v85, 7
    %v87 = vsub.s32 0, %v86
    %v88 = vrot.slane %v83, %v87
    %v91 = vsel %vm54, %v77, 0
    %v94 = vsel %vm54, %v78, 0
    %96 = vmatprep.subr.mxu0 0.0
    %97 = vmatpush1.msra.mxu0 %v79
    %98 = vmatprep.subr.mxu0 0.0
    %99 = vmatpush1.msra.mxu0 %v80
    %100 = vmatprep.subr.mxu0 0.0
    %101 = vmatpush1.msra.mxu0 %v81
    %102 = vmatprep.subr.mxu0 0.0
    %103 = vmatpush1.msra.mxu0 %v82
    %104 = vmatprep.subr.mxu0 0.0
    %105 = vmatpush1.msra.mxu0 0.0
    %106 = vmatprep.subr.mxu0 0.0
    %107 = vmatpush1.msra.mxu0 0.0
    %108 = vmatprep.subr.mxu0 0.0
    %109 = vmatpush1.msra.mxu0 0.0
    %110 = vmatprep.subr.mxu0 0.0
    %111 = vmatpush1.msra.mxu0 0.0
    %112 = vmatprep.subr.mxu0 0.0
    %113 = vmatpush1.msra.mxu0 0.0
    %114 = vmatprep.subr.mxu0 0.0
    %115 = vmatpush1.msra.mxu0 0.0
    %116 = vmatprep.subr.mxu0 0.0
    %117 = vmatpush1.msra.mxu0 0.0
    %118 = vmatprep.subr.mxu0 0.0
    %119 = vmatpush1.msra.mxu0 0.0
    %120 = vmatprep.subr.mxu0 0.0
    %121 = vmatpush1.msra.mxu0 0.0
    %122 = vmatprep.subr.mxu0 0.0
    %123 = vmatpush1.msra.mxu0 0.0
    %124 = vmatprep.subr.mxu0 0.0
    %125 = vmatpush1.msra.mxu0 0.0
    %126 = vmatprep.subr.mxu0 0.0
    %127 = vmatpush1.msra.mxu0 0.0
    %128 = vmatprep.subr.mxu0 0.0
    %129 = vmatpush1.msra.mxu0 0.0
    %130 = vmatprep.subr.mxu0 0.0
    %131 = vmatpush1.msra.mxu0 0.0
    %132 = vmatprep.subr.mxu0 0.0
    %133 = vmatpush1.msra.mxu0 0.0
    %134 = vmatprep.subr.mxu0 0.0
    %135 = vmatpush1.msra.mxu0 0.0
    %136 = vmatprep.subr.mxu0 0.0
    %137 = vmatpush1.msra.mxu0 0.0
    %138 = vmatprep.subr.mxu0 0.0
    %139 = vmatpush1.msra.mxu0 0.0
    %140 = vmatprep.subr.mxu0 0.0
    %141 = vmatpush1.msra.mxu0 0.0
    %142 = vmatprep.subr.mxu0 0.0
    %143 = vmatpush1.msra.mxu0 0.0
    %144 = vmatprep.subr.mxu0 0.0
    %145 = vmatpush1.msra.mxu0 0.0
    %146 = vmatprep.subr.mxu0 0.0
    %147 = vmatpush1.msra.mxu0 0.0
    %148 = vmatprep.subr.mxu0 0.0
    %149 = vmatpush1.msra.mxu0 0.0
    %150 = vmatprep.subr.mxu0 0.0
    %151 = vmatpush1.msra.mxu0 0.0
    %152 = vmatprep.subr.mxu0 0.0
    %153 = vmatpush1.msra.mxu0 0.0
    %154 = vmatprep.subr.mxu0 0.0
    %155 = vmatpush1.msra.mxu0 0.0
    %156 = vmatprep.subr.mxu0 0.0
    %157 = vmatpush1.msra.mxu0 0.0
    %158 = vmatprep.subr.mxu0 0.0
    %159 = vmatpush1.msra.mxu0 0.0
    %160 = vmatprep.mubr.f32.mxu0 0.0
    %161 = vmatmul.mubr.f32.gmra.mrb[0].mxu0 %v91
    %v162 = vpop.f32.mrb[0].mxu0
    %v163 = vadd.f32 %v88, %v162
    %v164 = vpop.f32.mrb[0].mxu0
    %165 = vmatprep.mubr.f32.mxu0 0.0
    %166 = vmatmul.mubr.f32.gmra.mrb[0].mxu0 %v94
    %v167 = vpop.f32.mrb[0].mxu0
    %v168 = vadd.f32 %v88, %v167
    %v169 = vpop.f32.mrb[0].mxu0
    %170 = vdwg.mxu0
    %v171 = vxor.u32 %v163, 2147483648
    %v172 = vxor.u32 %v168, 2147483648
    %v173 = vmul.f32 %v171, 1.442695
    %v174 = vpow.pop %v173
    %v175 = vmul.f32 %v172, 1.442695
    %v176 = vpow.pop %v175
    %v177 = vadd.f32 %v174, 1.0
    %v178 = vadd.f32 %v176, 1.0
    %v179 = vrcp.pop %v177
    %v180 = vmul.f32 1.0, %v179
    %v181 = vrcp.pop %v178
    %v182 = vmul.f32 1.0, %v181
    %v183 = vmul.f32 %v163, %v180
    %v184 = vmul.f32 %v168, %v182
    %v185 = vld [vmem:[%s4] sm:$0xff]
    %v186 = vld [vmem:[%s4 + $0x8] sm:$0xff]
    %v187 = vld [vmem:[%s4 + $0x10] sm:$0xff]
    %v188 = vld [vmem:[%s4 + $0x18] sm:$0xff]
    %v189 = vld [vmem:[%s4 + $0x20] sm:$0xff]
    %v190 = vld [vmem:[%s4 + $0x28] sm:$0xff]
    %v191 = vld [vmem:[%s4 + $0x30] sm:$0xff]
    %v192 = vld [vmem:[%s4 + $0x38] sm:$0xff]
    %vm193 = vcmask 523264
    %v195 = vsel %vm193, %v183, 0
    %v198 = vsel %vm193, %v184, 0
    %200 = vmatprep.subr.mxu0 0.0
    %201 = vmatpush1.msra.mxu0 %v185
    %202 = vmatprep.subr.mxu0 0.0
    %203 = vmatpush1.msra.mxu0 %v186
    %204 = vmatprep.subr.mxu0 0.0
    %205 = vmatpush1.msra.mxu0 %v187
    %206 = vmatprep.subr.mxu0 0.0
    %207 = vmatpush1.msra.mxu0 %v188
    %208 = vmatprep.subr.mxu0 0.0
    %209 = vmatpush1.msra.mxu0 %v189
    %210 = vmatprep.subr.mxu0 0.0
    %211 = vmatpush1.msra.mxu0 %v190
    %212 = vmatprep.subr.mxu0 0.0
    %213 = vmatpush1.msra.mxu0 %v191
    %214 = vmatprep.subr.mxu0 0.0
    %215 = vmatpush1.msra.mxu0 %v192
    %216 = vmatprep.subr.mxu0 0.0
    %217 = vmatpush1.msra.mxu0 0.0
    %218 = vmatprep.subr.mxu0 0.0
    %219 = vmatpush1.msra.mxu0 0.0
    %220 = vmatprep.subr.mxu0 0.0
    %221 = vmatpush1.msra.mxu0 0.0
    %222 = vmatprep.subr.mxu0 0.0
    %223 = vmatpush1.msra.mxu0 0.0
    %224 = vmatprep.subr.mxu0 0.0
    %225 = vmatpush1.msra.mxu0 0.0
    %226 = vmatprep.subr.mxu0 0.0
    %227 = vmatpush1.msra.mxu0 0.0
    %228 = vmatprep.subr.mxu0 0.0
    %229 = vmatpush1.msra.mxu0 0.0
    %230 = vmatprep.subr.mxu0 0.0
    %231 = vmatpush1.msra.mxu0 0.0
    %232 = vmatprep.subr.mxu0 0.0
    %233 = vmatpush1.msra.mxu0 0.0
    %234 = vmatprep.subr.mxu0 0.0
    %235 = vmatpush1.msra.mxu0 0.0
    %236 = vmatprep.subr.mxu0 0.0
    %237 = vmatpush1.msra.mxu0 0.0
    %238 = vmatprep.subr.mxu0 0.0
    %239 = vmatpush1.msra.mxu0 0.0
    %240 = vmatprep.subr.mxu0 0.0
    %241 = vmatpush1.msra.mxu0 0.0
    %242 = vmatprep.subr.mxu0 0.0
    %243 = vmatpush1.msra.mxu0 0.0
    %244 = vmatprep.subr.mxu0 0.0
    %245 = vmatpush1.msra.mxu0 0.0
    %246 = vmatprep.subr.mxu0 0.0
    %247 = vmatpush1.msra.mxu0 0.0
    %248 = vmatprep.subr.mxu0 0.0
    %249 = vmatpush1.msra.mxu0 0.0
    %250 = vmatprep.subr.mxu0 0.0
    %251 = vmatpush1.msra.mxu0 0.0
    %252 = vmatprep.subr.mxu0 0.0
    %253 = vmatpush1.msra.mxu0 0.0
    %254 = vmatprep.subr.mxu0 0.0
    %255 = vmatpush1.msra.mxu0 0.0
    %256 = vmatprep.subr.mxu0 0.0
    %257 = vmatpush1.msra.mxu0 0.0
    %258 = vmatprep.subr.mxu0 0.0
    %259 = vmatpush1.msra.mxu0 0.0
    %260 = vmatprep.subr.mxu0 0.0
    %261 = vmatpush1.msra.mxu0 0.0
    %262 = vmatprep.subr.mxu0 0.0
    %263 = vmatpush1.msra.mxu0 0.0
    %264 = vmatprep.mubr.f32.mxu0 0.0
    %265 = vmatmul.mubr.f32.gmra.mrb[0].mxu0 %v195
    %v266 = vpop.f32.mrb[0].mxu0
    %v267 = vadd.f32 0.0, %v266
    %v268 = vpop.f32.mrb[0].mxu0
    %269 = vmatprep.mubr.f32.mxu0 0.0
    %270 = vmatmul.mubr.f32.gmra.mrb[0].mxu0 %v198
    %v271 = vpop.f32.mrb[0].mxu0
    %v272 = vadd.f32 0.0, %v271
    %v273 = vpop.f32.mrb[0].mxu0
    %274 = vdwg.mxu0
    %v275 = vld [vmem:[%s5] sm:$0xf]
    %v276 = vld [vmem:[%s6] sm:$0x1]
    %v278 = vlaneseq
    %v279 = vshrl.u32 %v278, 7
    %v280 = vsub.s32 0, %v279
    %v281 = vrot.slane %v276, %v280
    %vm283 = vcmask 31744
    %v285 = vsel %vm283, %v267, 0
    %v288 = vsel %vm283, %v272, 0
    %vm290 = vcmask 1043456
    %v292 = vsel %vm290, %v275, 0
    %294 = vmatprep.subr.mxu0 0.0
    %295 = vmatpush1.msra.mxu0 %v292
    %296 = vmatprep.subr.mxu0 0.0
    %297 = vmatpush1.msra.mxu0 0.0
    %298 = vmatprep.subr.mxu0 0.0
    %299 = vmatpush1.msra.mxu0 0.0
    %300 = vmatprep.subr.mxu0 0.0
    %301 = vmatpush1.msra.mxu0 0.0
    %302 = vmatprep.subr.mxu0 0.0
    %303 = vmatpush1.msra.mxu0 0.0
    %304 = vmatprep.subr.mxu0 0.0
    %305 = vmatpush1.msra.mxu0 0.0
    %306 = vmatprep.subr.mxu0 0.0
    %307 = vmatpush1.msra.mxu0 0.0
    %308 = vmatprep.subr.mxu0 0.0
    %309 = vmatpush1.msra.mxu0 0.0
    %310 = vmatprep.subr.mxu0 0.0
    %311 = vmatpush1.msra.mxu0 0.0
    %312 = vmatprep.subr.mxu0 0.0
    %313 = vmatpush1.msra.mxu0 0.0
    %314 = vmatprep.subr.mxu0 0.0
    %315 = vmatpush1.msra.mxu0 0.0
    %316 = vmatprep.subr.mxu0 0.0
    %317 = vmatpush1.msra.mxu0 0.0
    %318 = vmatprep.subr.mxu0 0.0
    %319 = vmatpush1.msra.mxu0 0.0
    %320 = vmatprep.subr.mxu0 0.0
    %321 = vmatpush1.msra.mxu0 0.0
    %322 = vmatprep.subr.mxu0 0.0
    %323 = vmatpush1.msra.mxu0 0.0
    %324 = vmatprep.subr.mxu0 0.0
    %325 = vmatpush1.msra.mxu0 0.0
    %326 = vmatprep.subr.mxu0 0.0
    %327 = vmatpush1.msra.mxu0 0.0
    %328 = vmatprep.subr.mxu0 0.0
    %329 = vmatpush1.msra.mxu0 0.0
    %330 = vmatprep.subr.mxu0 0.0
    %331 = vmatpush1.msra.mxu0 0.0
    %332 = vmatprep.subr.mxu0 0.0
    %333 = vmatpush1.msra.mxu0 0.0
    %334 = vmatprep.subr.mxu0 0.0
    %335 = vmatpush1.msra.mxu0 0.0
    %336 = vmatprep.subr.mxu0 0.0
    %337 = vmatpush1.msra.mxu0 0.0
    %338 = vmatprep.subr.mxu0 0.0
    %339 = vmatpush1.msra.mxu0 0.0
    %340 = vmatprep.subr.mxu0 0.0
    %341 = vmatpush1.msra.mxu0 0.0
    %342 = vmatprep.subr.mxu0 0.0
    %343 = vmatpush1.msra.mxu0 0.0
    %344 = vmatprep.subr.mxu0 0.0
    %345 = vmatpush1.msra.mxu0 0.0
    %346 = vmatprep.subr.mxu0 0.0
    %347 = vmatpush1.msra.mxu0 0.0
    %348 = vmatprep.subr.mxu0 0.0
    %349 = vmatpush1.msra.mxu0 0.0
    %350 = vmatprep.subr.mxu0 0.0
    %351 = vmatpush1.msra.mxu0 0.0
    %352 = vmatprep.subr.mxu0 0.0
    %353 = vmatpush1.msra.mxu0 0.0
    %354 = vmatprep.subr.mxu0 0.0
    %355 = vmatpush1.msra.mxu0 0.0
    %356 = vmatprep.subr.mxu0 0.0
    %357 = vmatpush1.msra.mxu0 0.0
    %358 = vmatprep.mubr.f32.mxu0 0.0
    %359 = vmatmul.mubr.f32.gmra.mrb[0].mxu0 %v285
    %v360 = vpop.f32.mrb[0].mxu0
    %v361 = vadd.f32 %v281, %v360
    %v362 = vpop.f32.mrb[0].mxu0
    %363 = vmatprep.mubr.f32.mxu0 0.0
    %364 = vmatmul.mubr.f32.gmra.mrb[0].mxu0 %v288
    %v365 = vpop.f32.mrb[0].mxu0
    %v366 = vadd.f32 %v281, %v365
    %v367 = vpop.f32.mrb[0].mxu0
    %368 = vdwg.mxu0
    %v369 = vmax.f32 %v361, 0.0
    %v370 = vmax.f32 %v366, 0.0
    %vm371 = vcmp.ne.f32.partialorder %v361, %v361
    %vm372 = vcmp.ne.f32.partialorder %v366, %v366
    %v373 = vadd.f32 %v361, 0.0
    %v374 = vadd.f32 %v366, 0.0
    %v375 = vand.u32 2147483647, %v361
    %v376 = vand.u32 2147483647, %v366
    %v377 = vsub.f32 0.0, %v375
    %v378 = vsub.f32 0.0, %v376
    %v379 = vmul.f32 %v377, 1.442695
    %v380 = vpow.pop %v379
    %v381 = vmul.f32 %v378, 1.442695
    %v382 = vpow.pop %v381
    %v383 = vadd.f32 %v380, 1.0
    %v384 = vlog2.pop %v383
    %v385 = vmul.f32 %v384, 0.6931472
    %v386 = vmul.f32 -0.5, %v380
    %v387 = vadd.f32 %v386, 1.0
    %v388 = vmul.f32 %v387, %v380
    %v389 = vand.u32 2147483647, %v380
    %vm390 = vcmp.lt.f32.partialorder %v389, 0.0004427343
    %v391 = vsel %vm390, %v388, %v385
    %v392 = vadd.f32 %v382, 1.0
    %v393 = vlog2.pop %v392
    %v394 = vmul.f32 %v393, 0.6931472
    %v395 = vmul.f32 -0.5, %v382
    %v396 = vadd.f32 %v395, 1.0
    %v397 = vmul.f32 %v396, %v382
    %v398 = vand.u32 2147483647, %v382
    %vm399 = vcmp.lt.f32.partialorder %v398, 0.0004427343
    %v400 = vsel %vm399, %v397, %v394
    %v401 = vadd.f32 %v369, %v391
    %v402 = vadd.f32 %v370, %v400
    %v403 = vsel %vm371, %v373, %v401
    %v404 = vsel %vm372, %v374, %v402
    %v405 = vmul.f32 %v403, %v183
    %v406 = vmul.f32 %v404, %v184
    %v407 = vld [vmem:[%s7] sm:$0xff]
    %v408 = vld [vmem:[%s7 + $0x8] sm:$0xff]
    %v409 = vmul.f32 %v407, 1.442695
    %v410 = vpow.pop %v409
    %v411 = vmul.f32 %v408, 1.442695
    %v412 = vpow.pop %v411
    %v413 = vsub.f32 0.0, %v410
    %v414 = vsub.f32 0.0, %v412
    %415 = vrot.lane.b32.xlu0 %v267, 124
    %v416 = vpop.permute.xlu0 %415
    %417 = vrot.lane.b32.xlu0 %v272, 124
    %v418 = vpop.permute.xlu0 %417
    %421 = vxpose.xlu0.b32.start [1/16] %v416, 128
    %422 = vxpose.xlu0.b32.cont [2/16] %v418, 128
    %423 = vxpose.xlu0.b32.cont [3/16] 0.0, 128
    %424 = vxpose.xlu0.b32.cont [4/16] 0.0, 128
    %425 = vxpose.xlu0.b32.cont [5/16] 0.0, 128
    %426 = vxpose.xlu0.b32.cont [6/16] 0.0, 128
    %427 = vxpose.xlu0.b32.cont [7/16] 0.0, 128
    %428 = vxpose.xlu0.b32.cont [8/16] 0.0, 128
    %429 = vxpose.xlu0.b32.cont [9/16] 0.0, 128
    %430 = vxpose.xlu0.b32.cont [10/16] 0.0, 128
    %431 = vxpose.xlu0.b32.cont [11/16] 0.0, 128
    %432 = vxpose.xlu0.b32.cont [12/16] 0.0, 128
    %433 = vxpose.xlu0.b32.cont [13/16] 0.0, 128
    %434 = vxpose.xlu0.b32.cont [14/16] 0.0, 128
    %435 = vxpose.xlu0.b32.cont [15/16] 0.0, 128
    %436 = vxpose.xlu0.b32.end [16/16] 0.0, 128
    %v437 = vpop.trf.xlu0
    %v438 = vpop.trf.xlu0
    %v439 = vpop.trf.xlu0
    %v440 = vpop.trf.xlu0
    %v441 = vpop.trf.xlu0
    %v442 = vpop.trf.xlu0
    %v443 = vpop.trf.xlu0
    %v444 = vpop.trf.xlu0
    %v445 = vpop.trf.xlu0
    %v446 = vpop.trf.xlu0
    %v447 = vpop.trf.xlu0
    %v448 = vpop.trf.xlu0
    %v449 = vpop.trf.xlu0
    %v450 = vpop.trf.xlu0
    %v451 = vpop.trf.xlu0
    %v452 = vpop.trf.xlu0
    %453 = vrot.lane.b32.xlu0 %v267, 108
    %v454 = vpop.permute.xlu0 %453
    %455 = vrot.lane.b32.xlu0 %v272, 108
    %v456 = vpop.permute.xlu0 %455
    %459 = vxpose.xlu0.b32.start [1/16] %v454, 128
    %460 = vxpose.xlu0.b32.cont [2/16] %v456, 128
    %461 = vxpose.xlu0.b32.cont [3/16] 0.0, 128
    %462 = vxpose.xlu0.b32.cont [4/16] 0.0, 128
    %463 = vxpose.xlu0.b32.cont [5/16] 0.0, 128
    %464 = vxpose.xlu0.b32.cont [6/16] 0.0, 128
    %465 = vxpose.xlu0.b32.cont [7/16] 0.0, 128
    %466 = vxpose.xlu0.b32.cont [8/16] 0.0, 128
    %467 = vxpose.xlu0.b32.cont [9/16] 0.0, 128
    %468 = vxpose.xlu0.b32.cont [10/16] 0.0, 128
    %469 = vxpose.xlu0.b32.cont [11/16] 0.0, 128
    %470 = vxpose.xlu0.b32.cont [12/16] 0.0, 128
    %471 = vxpose.xlu0.b32.cont [13/16] 0.0, 128
    %472 = vxpose.xlu0.b32.cont [14/16] 0.0, 128
    %473 = vxpose.xlu0.b32.cont [15/16] 0.0, 128
    %474 = vxpose.xlu0.b32.end [16/16] 0.0, 128
    %v475 = vpop.trf.xlu0
    %v476 = vpop.trf.xlu0
    %v477 = vpop.trf.xlu0
    %v478 = vpop.trf.xlu0
    %v479 = vpop.trf.xlu0
    %v480 = vpop.trf.xlu0
    %v481 = vpop.trf.xlu0
    %v482 = vpop.trf.xlu0
    %v483 = vpop.trf.xlu0
    %v484 = vpop.trf.xlu0
    %v485 = vpop.trf.xlu0
    %v486 = vpop.trf.xlu0
    %v487 = vpop.trf.xlu0
    %v488 = vpop.trf.xlu0
    %v489 = vpop.trf.xlu0
    %v490 = vpop.trf.xlu0
    %v491 = vlaneseq
    %v492 = vshrl.u32 %v491, 7
    %v493 = vsub.s32 0, %v492
    %v494 = vrot.slane %v405, %v493
    %496 = vset.pattern.permute.xlu0 0
    %497 = vperm.xlu0 %496, %v437
    %v498 = vpop.permute.xlu0 %497
    %501 = vset.pattern.permute.xlu0 0
    %502 = vperm.xlu0 %501, %v438
    %v503 = vpop.permute.xlu0 %502
    %v505 = vmul.f32 %v494, %v498
    %v506 = vmul.f32 %v494, %v503
    %508 = vset.pattern.permute.xlu0 0
    %509 = vperm.xlu0 %508, %v475
    %v510 = vpop.permute.xlu0 %509
    %513 = vset.pattern.permute.xlu0 0
    %514 = vperm.xlu0 %513, %v476
    %v515 = vpop.permute.xlu0 %514
    %v517 = vmul.f32 %v505, %v510
    %v518 = vmul.f32 %v506, %v515
    %v519 = vsel %vm193, %v517, 0.0
    %v520 = vsel %vm193, %v518, 0.0
    %v521 = vadd.f32 %v519, %v520
    %v522 = vrot.slane %v521, 4
    %v523 = vadd.f32 %v521, %v522
    %v524 = vrot.slane %v523, 2
    %v525 = vadd.f32 %v523, %v524
    %v526 = vrot.slane %v525, 1
    %v527 = vadd.f32 %v525, %v526
    %vm528 = vcmask 516096
    %529 = vst.msk [vmem:[#allocation2] sm:$0x1] %vm528, %v527
    %v530 = vlaneseq
    %v531 = vshrl.u32 %v530, 7
    %v532 = vsub.s32 0, %v531
    %v533 = vrot.slane %v406, %v532
    %534 = vset.pattern.permute.xlu0 8
    %535 = vperm.xlu0 %534, %v437
    %v536 = vpop.permute.xlu0 %535
    %538 = vset.pattern.permute.xlu0 8
    %539 = vperm.xlu0 %538, %v438
    %v540 = vpop.permute.xlu0 %539
    %v542 = vmul.f32 %v533, %v536
    %v543 = vmul.f32 %v533, %v540
    %544 = vset.pattern.permute.xlu0 8
    %545 = vperm.xlu0 %544, %v475
    %v546 = vpop.permute.xlu0 %545
    %548 = vset.pattern.permute.xlu0 8
    %549 = vperm.xlu0 %548, %v476
    %v550 = vpop.permute.xlu0 %549
    %v552 = vmul.f32 %v542, %v546
    %v553 = vmul.f32 %v543, %v550
    %v554 = vsel %vm193, %v552, 0.0
    %v555 = vsel %vm193, %v553, 0.0
    %v556 = vadd.f32 %v554, %v555
    %v557 = vrot.slane %v556, 4
    %v558 = vadd.f32 %v556, %v557
    %v559 = vrot.slane %v558, 2
    %v560 = vadd.f32 %v558, %v559
    %v561 = vrot.slane %v560, 1
    %v562 = vadd.f32 %v560, %v561
    %563 = vst.msk [vmem:[#allocation2 + $0x8] sm:$0x1] %vm528, %v562
    %v564 = vlaneseq
    %v565 = vshrl.u32 %v564, 7
    %v566 = vsub.s32 1, %v565
    %v567 = vrot.slane %v405, %v566
    %568 = vset.pattern.permute.xlu0 1
    %569 = vperm.xlu0 %568, %v437
    %v570 = vpop.permute.xlu0 %569
    %572 = vset.pattern.permute.xlu0 1
    %573 = vperm.xlu0 %572, %v438
    %v574 = vpop.permute.xlu0 %573
    %v576 = vmul.f32 %v567, %v570
    %v577 = vmul.f32 %v567, %v574
    %v578 = vlaneseq
    %v579 = vshrl.u32 %v578, 7
    %v580 = vsub.s32 1, %v579
    %v581 = vrot.slane %v403, %v580
    %583 = vset.pattern.permute.xlu0 0
    %584 = vperm.xlu0 %583, %v413
    %v585 = vpop.permute.xlu0 %584
    %588 = vset.pattern.permute.xlu0 0
    %589 = vperm.xlu0 %588, %v414
    %v590 = vpop.permute.xlu0 %589
    %v592 = vmul.f32 %v581, %v585
    %v593 = vmul.f32 %v581, %v590
    %v594 = vmul.f32 %v592, 1.442695
    %v595 = vpow.pop %v594
    %v596 = vmul.f32 %v593, 1.442695
    %v597 = vpow.pop %v596
    %v598 = vmul.f32 %v595, %v505
    %v599 = vmul.f32 %v597, %v506
    %v600 = vadd.f32 %v598, %v576
    %v601 = vadd.f32 %v599, %v577
    %602 = vset.pattern.permute.xlu0 1
    %603 = vperm.xlu0 %602, %v475
    %v604 = vpop.permute.xlu0 %603
    %606 = vset.pattern.permute.xlu0 1
    %607 = vperm.xlu0 %606, %v476
    %v608 = vpop.permute.xlu0 %607
    %v610 = vmul.f32 %v600, %v604
    %v611 = vmul.f32 %v601, %v608
    %v612 = vsel %vm193, %v610, 0.0
    %v613 = vsel %vm193, %v611, 0.0
    %v614 = vadd.f32 %v612, %v613
    %v615 = vrot.slane %v614, 4
    %v616 = vadd.f32 %v614, %v615
    %v617 = vrot.slane %v616, 2
    %v618 = vadd.f32 %v616, %v617
    %v619 = vrot.slane %v618, 1
    %v620 = vadd.f32 %v618, %v619
    %621 = vst.msk [vmem:[#allocation2 + $0x1] sm:$0x1] %vm528, %v620
    %v622 = vlaneseq
    %v623 = vshrl.u32 %v622, 7
    %v624 = vsub.s32 1, %v623
    %v625 = vrot.slane %v406, %v624
    %626 = vset.pattern.permute.xlu0 9
    %627 = vperm.xlu0 %626, %v437
    %v628 = vpop.permute.xlu0 %627
    %630 = vset.pattern.permute.xlu0 9
    %631 = vperm.xlu0 %630, %v438
    %v632 = vpop.permute.xlu0 %631
    %v634 = vmul.f32 %v625, %v628
    %v635 = vmul.f32 %v625, %v632
    %v636 = vlaneseq
    %v637 = vshrl.u32 %v636, 7
    %v638 = vsub.s32 1, %v637
    %v639 = vrot.slane %v404, %v638
    %v640 = vmul.f32 %v639, %v585
    %v641 = vmul.f32 %v639, %v590
    %v642 = vmul.f32 %v640, 1.442695
    %v643 = vpow.pop %v642
    %v644 = vmul.f32 %v641, 1.442695
    %v645 = vpow.pop %v644
    %v646 = vmul.f32 %v643, %v542
    %v647 = vmul.f32 %v645, %v543
    %v648 = vadd.f32 %v646, %v634
    %v649 = vadd.f32 %v647, %v635
    %650 = vset.pattern.permute.xlu0 9
    %651 = vperm.xlu0 %650, %v475
    %v652 = vpop.permute.xlu0 %651
    %654 = vset.pattern.permute.xlu0 9
    %655 = vperm.xlu0 %654, %v476
    %v656 = vpop.permute.xlu0 %655
    %v658 = vmul.f32 %v648, %v652
    %v659 = vmul.f32 %v649, %v656
    %v660 = vsel %vm193, %v658, 0.0
    %v661 = vsel %vm193, %v659, 0.0
    %v662 = vadd.f32 %v660, %v661
    %v663 = vrot.slane %v662, 4
    %v664 = vadd.f32 %v662, %v663
    %v665 = vrot.slane %v664, 2
    %v666 = vadd.f32 %v664, %v665
    %v667 = vrot.slane %v666, 1
    %v668 = vadd.f32 %v666, %v667
    %669 = vst.msk [vmem:[#allocation2 + $0x9] sm:$0x1] %vm528, %v668
    %v670 = vlaneseq
    %v671 = vshrl.u32 %v670, 7
    %v672 = vsub.s32 2, %v671
    %v673 = vrot.slane %v405, %v672
    %674 = vset.pattern.permute.xlu0 2
    %675 = vperm.xlu0 %674, %v437
    %v676 = vpop.permute.xlu0 %675
    %678 = vset.pattern.permute.xlu0 2
    %679 = vperm.xlu0 %678, %v438
    %v680 = vpop.permute.xlu0 %679
    %v682 = vmul.f32 %v673, %v676
    %v683 = vmul.f32 %v673, %v680
    %v684 = vlaneseq
    %v685 = vshrl.u32 %v684, 7
    %v686 = vsub.s32 2, %v685
    %v687 = vrot.slane %v403, %v686
    %v688 = vmul.f32 %v687, %v585
    %v689 = vmul.f32 %v687, %v590
    %v690 = vmul.f32 %v688, 1.442695
    %v691 = vpow.pop %v690
    %v692 = vmul.f32 %v689, 1.442695
    %v693 = vpow.pop %v692
    %v694 = vmul.f32 %v691, %v600
    %v695 = vmul.f32 %v693, %v601
    %v696 = vadd.f32 %v694, %v682
    %v697 = vadd.f32 %v695, %v683
    %698 = vset.pattern.permute.xlu0 2
    %699 = vperm.xlu0 %698, %v475
    %v700 = vpop.permute.xlu0 %699
    %702 = vset.pattern.permute.xlu0 2
    %703 = vperm.xlu0 %702, %v476
    %v704 = vpop.permute.xlu0 %703
    %v706 = vmul.f32 %v696, %v700
    %v707 = vmul.f32 %v697, %v704
    %v708 = vsel %vm193, %v706, 0.0
    %v709 = vsel %vm193, %v707, 0.0
    %v710 = vadd.f32 %v708, %v709
    %v711 = vrot.slane %v710, 4
    %v712 = vadd.f32 %v710, %v711
    %v713 = vrot.slane %v712, 2
    %v714 = vadd.f32 %v712, %v713
    %v715 = vrot.slane %v714, 1
    %v716 = vadd.f32 %v714, %v715
    %717 = vst.msk [vmem:[#allocation2 + $0x2] sm:$0x1] %vm528, %v716
    %v718 = vlaneseq
    %v719 = vshrl.u32 %v718, 7
    %v720 = vsub.s32 2, %v719
    %v721 = vrot.slane %v406, %v720
    %722 = vset.pattern.permute.xlu0 10
    %723 = vperm.xlu0 %722, %v437
    %v724 = vpop.permute.xlu0 %723
    %726 = vset.pattern.permute.xlu0 10
    %727 = vperm.xlu0 %726, %v438
    %v728 = vpop.permute.xlu0 %727
    %v730 = vmul.f32 %v721, %v724
    %v731 = vmul.f32 %v721, %v728
    %v732 = vlaneseq
    %v733 = vshrl.u32 %v732, 7
    %v734 = vsub.s32 2, %v733
    %v735 = vrot.slane %v404, %v734
    %v736 = vmul.f32 %v735, %v585
    %v737 = vmul.f32 %v735, %v590
    %v738 = vmul.f32 %v736, 1.442695
    %v739 = vpow.pop %v738
    %v740 = vmul.f32 %v737, 1.442695
    %v741 = vpow.pop %v740
    %v742 = vmul.f32 %v739, %v648
    %v743 = vmul.f32 %v741, %v649
    %v744 = vadd.f32 %v742, %v730
    %v745 = vadd.f32 %v743, %v731
    %746 = vset.pattern.permute.xlu0 10
    %747 = vperm.xlu0 %746, %v475
    %v748 = vpop.permute.xlu0 %747
    %750 = vset.pattern.permute.xlu0 10
    %751 = vperm.xlu0 %750, %v476
    %v752 = vpop.permute.xlu0 %751
    %v754 = vmul.f32 %v744, %v748
    %v755 = vmul.f32 %v745, %v752
    %v756 = vsel %vm193, %v754, 0.0
    %v757 = vsel %vm193, %v755, 0.0
    %v758 = vadd.f32 %v756, %v757
    %v759 = vrot.slane %v758, 4
    %v760 = vadd.f32 %v758, %v759
    %v761 = vrot.slane %v760, 2
    %v762 = vadd.f32 %v760, %v761
    %v763 = vrot.slane %v762, 1
    %v764 = vadd.f32 %v762, %v763
    %765 = vst.msk [vmem:[#allocation2 + $0xa] sm:$0x1] %vm528, %v764
    %v766 = vlaneseq
    %v767 = vshrl.u32 %v766, 7
    %v768 = vsub.s32 3, %v767
    %v769 = vrot.slane %v405, %v768
    %770 = vset.pattern.permute.xlu0 3
    %771 = vperm.xlu0 %770, %v437
    %v772 = vpop.permute.xlu0 %771
    %774 = vset.pattern.permute.xlu0 3
    %775 = vperm.xlu0 %774, %v438
    %v776 = vpop.permute.xlu0 %775
    %v778 = vmul.f32 %v769, %v772
    %v779 = vmul.f32 %v769, %v776
    %v780 = vlaneseq
    %v781 = vshrl.u32 %v780, 7
    %v782 = vsub.s32 3, %v781
    %v783 = vrot.slane %v403, %v782
    %v784 = vmul.f32 %v783, %v585
    %v785 = vmul.f32 %v783, %v590
    %v786 = vmul.f32 %v784, 1.442695
    %v787 = vpow.pop %v786
    %v788 = vmul.f32 %v785, 1.442695
    %v789 = vpow.pop %v788
    %v790 = vmul.f32 %v787, %v696
    %v791 = vmul.f32 %v789, %v697
    %v792 = vadd.f32 %v790, %v778
    %v793 = vadd.f32 %v791, %v779
    %794 = vset.pattern.permute.xlu0 3
    %795 = vperm.xlu0 %794, %v475
    %v796 = vpop.permute.xlu0 %795
    %798 = vset.pattern.permute.xlu0 3
    %799 = vperm.xlu0 %798, %v476
    %v800 = vpop.permute.xlu0 %799
    %v802 = vmul.f32 %v792, %v796
    %v803 = vmul.f32 %v793, %v800
    %v804 = vsel %vm193, %v802, 0.0
    %v805 = vsel %vm193, %v803, 0.0
    %v806 = vadd.f32 %v804, %v805
    %v807 = vrot.slane %v806, 4
    %v808 = vadd.f32 %v806, %v807
    %v809 = vrot.slane %v808, 2
    %v810 = vadd.f32 %v808, %v809
    %v811 = vrot.slane %v810, 1
    %v812 = vadd.f32 %v810, %v811
    %813 = vst.msk [vmem:[#allocation2 + $0x3] sm:$0x1] %vm528, %v812
    %v814 = vlaneseq
    %v815 = vshrl.u32 %v814, 7
    %v816 = vsub.s32 3, %v815
    %v817 = vrot.slane %v406, %v816
    %818 = vset.pattern.permute.xlu0 11
    %819 = vperm.xlu0 %818, %v437
    %v820 = vpop.permute.xlu0 %819
    %822 = vset.pattern.permute.xlu0 11
    %823 = vperm.xlu0 %822, %v438
    %v824 = vpop.permute.xlu0 %823
    %v826 = vmul.f32 %v817, %v820
    %v827 = vmul.f32 %v817, %v824
    %v828 = vlaneseq
    %v829 = vshrl.u32 %v828, 7
    %v830 = vsub.s32 3, %v829
    %v831 = vrot.slane %v404, %v830
    %v832 = vmul.f32 %v831, %v585
    %v833 = vmul.f32 %v831, %v590
    %v834 = vmul.f32 %v832, 1.442695
    %v835 = vpow.pop %v834
    %v836 = vmul.f32 %v833, 1.442695
    %v837 = vpow.pop %v836
    %v838 = vmul.f32 %v835, %v744
    %v839 = vmul.f32 %v837, %v745
    %v840 = vadd.f32 %v838, %v826
    %v841 = vadd.f32 %v839, %v827
    %842 = vset.pattern.permute.xlu0 11
    %843 = vperm.xlu0 %842, %v475
    %v844 = vpop.permute.xlu0 %843
    %846 = vset.pattern.permute.xlu0 11
    %847 = vperm.xlu0 %846, %v476
    %v848 = vpop.permute.xlu0 %847
    %v850 = vmul.f32 %v840, %v844
    %v851 = vmul.f32 %v841, %v848
    %v852 = vsel %vm193, %v850, 0.0
    %v853 = vsel %vm193, %v851, 0.0
    %v854 = vadd.f32 %v852, %v853
    %v855 = vrot.slane %v854, 4
    %v856 = vadd.f32 %v854, %v855
    %v857 = vrot.slane %v856, 2
    %v858 = vadd.f32 %v856, %v857
    %v859 = vrot.slane %v858, 1
    %v860 = vadd.f32 %v858, %v859
    %861 = vst.msk [vmem:[#allocation2 + $0xb] sm:$0x1] %vm528, %v860
    %v862 = vlaneseq
    %v863 = vshrl.u32 %v862, 7
    %v864 = vsub.s32 4, %v863
    %v865 = vrot.slane %v405, %v864
    %866 = vset.pattern.permute.xlu0 4
    %867 = vperm.xlu0 %866, %v437
    %v868 = vpop.permute.xlu0 %867
    %870 = vset.pattern.permute.xlu0 4
    %871 = vperm.xlu0 %870, %v438
    %v872 = vpop.permute.xlu0 %871
    %v874 = vmul.f32 %v865, %v868
    %v875 = vmul.f32 %v865, %v872
    %v876 = vlaneseq
    %v877 = vshrl.u32 %v876, 7
    %v878 = vsub.s32 4, %v877
    %v879 = vrot.slane %v403, %v878
    %v880 = vmul.f32 %v879, %v585
    %v881 = vmul.f32 %v879, %v590
    %v882 = vmul.f32 %v880, 1.442695
    %v883 = vpow.pop %v882
    %v884 = vmul.f32 %v881, 1.442695
    %v885 = vpow.pop %v884
    %v886 = vmul.f32 %v883, %v792
    %v887 = vmul.f32 %v885, %v793
    %v888 = vadd.f32 %v886, %v874
    %v889 = vadd.f32 %v887, %v875
    %890 = vset.pattern.permute.xlu0 4
    %891 = vperm.xlu0 %890, %v475
    %v892 = vpop.permute.xlu0 %891
    %894 = vset.pattern.permute.xlu0 4
    %895 = vperm.xlu0 %894, %v476
    %v896 = vpop.permute.xlu0 %895
    %v898 = vmul.f32 %v888, %v892
    %v899 = vmul.f32 %v889, %v896
    %v900 = vsel %vm193, %v898, 0.0
    %v901 = vsel %vm193, %v899, 0.0
    %v902 = vadd.f32 %v900, %v901
    %v903 = vrot.slane %v902, 4
    %v904 = vadd.f32 %v902, %v903
    %v905 = vrot.slane %v904, 2
    %v906 = vadd.f32 %v904, %v905
    %v907 = vrot.slane %v906, 1
    %v908 = vadd.f32 %v906, %v907
    %909 = vst.msk [vmem:[#allocation2 + $0x4] sm:$0x1] %vm528, %v908
    %v910 = vlaneseq
    %v911 = vshrl.u32 %v910, 7
    %v912 = vsub.s32 4, %v911
    %v913 = vrot.slane %v406, %v912
    %914 = vset.pattern.permute.xlu0 12
    %915 = vperm.xlu0 %914, %v437
    %v916 = vpop.permute.xlu0 %915
    %918 = vset.pattern.permute.xlu0 12
    %919 = vperm.xlu0 %918, %v438
    %v920 = vpop.permute.xlu0 %919
    %v922 = vmul.f32 %v913, %v916
    %v923 = vmul.f32 %v913, %v920
    %v924 = vlaneseq
    %v925 = vshrl.u32 %v924, 7
    %v926 = vsub.s32 4, %v925
    %v927 = vrot.slane %v404, %v926
    %v928 = vmul.f32 %v927, %v585
    %v929 = vmul.f32 %v927, %v590
    %v930 = vmul.f32 %v928, 1.442695
    %v931 = vpow.pop %v930
    %v932 = vmul.f32 %v929, 1.442695
    %v933 = vpow.pop %v932
    %v934 = vmul.f32 %v931, %v840
    %v935 = vmul.f32 %v933, %v841
    %v936 = vadd.f32 %v934, %v922
    %v937 = vadd.f32 %v935, %v923
    %938 = vset.pattern.permute.xlu0 12
    %939 = vperm.xlu0 %938, %v475
    %v940 = vpop.permute.xlu0 %939
    %942 = vset.pattern.permute.xlu0 12
    %943 = vperm.xlu0 %942, %v476
    %v944 = vpop.permute.xlu0 %943
    %v946 = vmul.f32 %v936, %v940
    %v947 = vmul.f32 %v937, %v944
    %v948 = vsel %vm193, %v946, 0.0
    %v949 = vsel %vm193, %v947, 0.0
    %v950 = vadd.f32 %v948, %v949
    %v951 = vrot.slane %v950, 4
    %v952 = vadd.f32 %v950, %v951
    %v953 = vrot.slane %v952, 2
    %v954 = vadd.f32 %v952, %v953
    %v955 = vrot.slane %v954, 1
    %v956 = vadd.f32 %v954, %v955
    %957 = vst.msk [vmem:[#allocation2 + $0xc] sm:$0x1] %vm528, %v956
    %v958 = vlaneseq
    %v959 = vshrl.u32 %v958, 7
    %v960 = vsub.s32 5, %v959
    %v961 = vrot.slane %v405, %v960
    %962 = vset.pattern.permute.xlu0 5
    %963 = vperm.xlu0 %962, %v437
    %v964 = vpop.permute.xlu0 %963
    %966 = vset.pattern.permute.xlu0 5
    %967 = vperm.xlu0 %966, %v438
    %v968 = vpop.permute.xlu0 %967
    %v970 = vmul.f32 %v961, %v964
    %v971 = vmul.f32 %v961, %v968
    %v972 = vlaneseq
    %v973 = vshrl.u32 %v972, 7
    %v974 = vsub.s32 5, %v973
    %v975 = vrot.slane %v403, %v974
    %v976 = vmul.f32 %v975, %v585
    %v977 = vmul.f32 %v975, %v590
    %v978 = vmul.f32 %v976, 1.442695
    %v979 = vpow.pop %v978
    %v980 = vmul.f32 %v977, 1.442695
    %v981 = vpow.pop %v980
    %v982 = vmul.f32 %v979, %v888
    %v983 = vmul.f32 %v981, %v889
    %v984 = vadd.f32 %v982, %v970
    %v985 = vadd.f32 %v983, %v971
    %986 = vset.pattern.permute.xlu0 5
    %987 = vperm.xlu0 %986, %v475
    %v988 = vpop.permute.xlu0 %987
    %990 = vset.pattern.permute.xlu0 5
    %991 = vperm.xlu0 %990, %v476
    %v992 = vpop.permute.xlu0 %991
    %v994 = vmul.f32 %v984, %v988
    %v995 = vmul.f32 %v985, %v992
    %v996 = vsel %vm193, %v994, 0.0
    %v997 = vsel %vm193, %v995, 0.0
    %v998 = vadd.f32 %v996, %v997
    %v999 = vrot.slane %v998, 4
    %v1000 = vadd.f32 %v998, %v999
    %v1001 = vrot.slane %v1000, 2
    %v1002 = vadd.f32 %v1000, %v1001
    %v1003 = vrot.slane %v1002, 1
    %v1004 = vadd.f32 %v1002, %v1003
    %1005 = vst.msk [vmem:[#allocation2 + $0x5] sm:$0x1] %vm528, %v1004
    %v1006 = vlaneseq
    %v1007 = vshrl.u32 %v1006, 7
    %v1008 = vsub.s32 5, %v1007
    %v1009 = vrot.slane %v406, %v1008
    %1010 = vset.pattern.permute.xlu0 13
    %1011 = vperm.xlu0 %1010, %v437
    %v1012 = vpop.permute.xlu0 %1011
    %1014 = vset.pattern.permute.xlu0 13
    %1015 = vperm.xlu0 %1014, %v438
    %v1016 = vpop.permute.xlu0 %1015
    %v1018 = vmul.f32 %v1009, %v1012
    %v1019 = vmul.f32 %v1009, %v1016
    %v1020 = vlaneseq
    %v1021 = vshrl.u32 %v1020, 7
    %v1022 = vsub.s32 5, %v1021
    %v1023 = vrot.slane %v404, %v1022
    %v1024 = vmul.f32 %v1023, %v585
    %v1025 = vmul.f32 %v1023, %v590
    %v1026 = vmul.f32 %v1024, 1.442695
    %v1027 = vpow.pop %v1026
    %v1028 = vmul.f32 %v1025, 1.442695
    %v1029 = vpow.pop %v1028
    %v1030 = vmul.f32 %v1027, %v936
    %v1031 = vmul.f32 %v1029, %v937
    %v1032 = vadd.f32 %v1030, %v1018
    %v1033 = vadd.f32 %v1031, %v1019
    %1034 = vset.pattern.permute.xlu0 13
    %1035 = vperm.xlu0 %1034, %v475
    %v1036 = vpop.permute.xlu0 %1035
    %1038 = vset.pattern.permute.xlu0 13
    %1039 = vperm.xlu0 %1038, %v476
    %v1040 = vpop.permute.xlu0 %1039
    %v1042 = vmul.f32 %v1032, %v1036
    %v1043 = vmul.f32 %v1033, %v1040
    %v1044 = vsel %vm193, %v1042, 0.0
    %v1045 = vsel %vm193, %v1043, 0.0
    %v1046 = vadd.f32 %v1044, %v1045
    %v1047 = vrot.slane %v1046, 4
    %v1048 = vadd.f32 %v1046, %v1047
    %v1049 = vrot.slane %v1048, 2
    %v1050 = vadd.f32 %v1048, %v1049
    %v1051 = vrot.slane %v1050, 1
    %v1052 = vadd.f32 %v1050, %v1051
    %1053 = vst.msk [vmem:[#allocation2 + $0xd] sm:$0x1] %vm528, %v1052
    %v1054 = vlaneseq
    %v1055 = vshrl.u32 %v1054, 7
    %v1056 = vsub.s32 6, %v1055
    %v1057 = vrot.slane %v405, %v1056
    %1058 = vset.pattern.permute.xlu0 6
    %1059 = vperm.xlu0 %1058, %v437
    %v1060 = vpop.permute.xlu0 %1059
    %1062 = vset.pattern.permute.xlu0 6
    %1063 = vperm.xlu0 %1062, %v438
    %v1064 = vpop.permute.xlu0 %1063
    %v1066 = vmul.f32 %v1057, %v1060
    %v1067 = vmul.f32 %v1057, %v1064
    %v1068 = vlaneseq
    %v1069 = vshrl.u32 %v1068, 7
    %v1070 = vsub.s32 6, %v1069
    %v1071 = vrot.slane %v403, %v1070
    %v1072 = vmul.f32 %v1071, %v585
    %v1073 = vmul.f32 %v1071, %v590
    %v1074 = vmul.f32 %v1072, 1.442695
    %v1075 = vpow.pop %v1074
    %v1076 = vmul.f32 %v1073, 1.442695
    %v1077 = vpow.pop %v1076
    %v1078 = vmul.f32 %v1075, %v984
    %v1079 = vmul.f32 %v1077, %v985
    %v1080 = vadd.f32 %v1078, %v1066
    %v1081 = vadd.f32 %v1079, %v1067
    %1082 = vset.pattern.permute.xlu0 6
    %1083 = vperm.xlu0 %1082, %v475
    %v1084 = vpop.permute.xlu0 %1083
    %1086 = vset.pattern.permute.xlu0 6
    %1087 = vperm.xlu0 %1086, %v476
    %v1088 = vpop.permute.xlu0 %1087
    %v1090 = vmul.f32 %v1080, %v1084
    %v1091 = vmul.f32 %v1081, %v1088
    %v1092 = vsel %vm193, %v1090, 0.0
    %v1093 = vsel %vm193, %v1091, 0.0
    %v1094 = vadd.f32 %v1092, %v1093
    %v1095 = vrot.slane %v1094, 4
    %v1096 = vadd.f32 %v1094, %v1095
    %v1097 = vrot.slane %v1096, 2
    %v1098 = vadd.f32 %v1096, %v1097
    %v1099 = vrot.slane %v1098, 1
    %v1100 = vadd.f32 %v1098, %v1099
    %1101 = vst.msk [vmem:[#allocation2 + $0x6] sm:$0x1] %vm528, %v1100
    %v1102 = vlaneseq
    %v1103 = vshrl.u32 %v1102, 7
    %v1104 = vsub.s32 6, %v1103
    %v1105 = vrot.slane %v406, %v1104
    %1106 = vset.pattern.permute.xlu0 14
    %1107 = vperm.xlu0 %1106, %v437
    %v1108 = vpop.permute.xlu0 %1107
    %1110 = vset.pattern.permute.xlu0 14
    %1111 = vperm.xlu0 %1110, %v438
    %v1112 = vpop.permute.xlu0 %1111
    %v1114 = vmul.f32 %v1105, %v1108
    %v1115 = vmul.f32 %v1105, %v1112
    %v1116 = vlaneseq
    %v1117 = vshrl.u32 %v1116, 7
    %v1118 = vsub.s32 6, %v1117
    %v1119 = vrot.slane %v404, %v1118
    %v1120 = vmul.f32 %v1119, %v585
    %v1121 = vmul.f32 %v1119, %v590
    %v1122 = vmul.f32 %v1120, 1.442695
    %v1123 = vpow.pop %v1122
    %v1124 = vmul.f32 %v1121, 1.442695
    %v1125 = vpow.pop %v1124
    %v1126 = vmul.f32 %v1123, %v1032
    %v1127 = vmul.f32 %v1125, %v1033
    %v1128 = vadd.f32 %v1126, %v1114
    %v1129 = vadd.f32 %v1127, %v1115
    %1130 = vset.pattern.permute.xlu0 14
    %1131 = vperm.xlu0 %1130, %v475
    %v1132 = vpop.permute.xlu0 %1131
    %1134 = vset.pattern.permute.xlu0 14
    %1135 = vperm.xlu0 %1134, %v476
    %v1136 = vpop.permute.xlu0 %1135
    %v1138 = vmul.f32 %v1128, %v1132
    %v1139 = vmul.f32 %v1129, %v1136
    %v1140 = vsel %vm193, %v1138, 0.0
    %v1141 = vsel %vm193, %v1139, 0.0
    %v1142 = vadd.f32 %v1140, %v1141
    %v1143 = vrot.slane %v1142, 4
    %v1144 = vadd.f32 %v1142, %v1143
    %v1145 = vrot.slane %v1144, 2
    %v1146 = vadd.f32 %v1144, %v1145
    %v1147 = vrot.slane %v1146, 1
    %v1148 = vadd.f32 %v1146, %v1147
    %1149 = vst.msk [vmem:[#allocation2 + $0xe] sm:$0x1] %vm528, %v1148
    %v1150 = vlaneseq
    %v1151 = vshrl.u32 %v1150, 7
    %v1152 = vsub.s32 7, %v1151
    %v1153 = vrot.slane %v405, %v1152
    %1154 = vset.pattern.permute.xlu0 7
    %1155 = vperm.xlu0 %1154, %v437
    %v1156 = vpop.permute.xlu0 %1155
    %1158 = vset.pattern.permute.xlu0 7
    %1159 = vperm.xlu0 %1158, %v438
    %v1160 = vpop.permute.xlu0 %1159
    %v1162 = vmul.f32 %v1153, %v1156
    %v1163 = vmul.f32 %v1153, %v1160
    %v1164 = vlaneseq
    %v1165 = vshrl.u32 %v1164, 7
    %v1166 = vsub.s32 7, %v1165
    %v1167 = vrot.slane %v403, %v1166
    %v1168 = vmul.f32 %v1167, %v585
    %v1169 = vmul.f32 %v1167, %v590
    %v1170 = vmul.f32 %v1168, 1.442695
    %v1171 = vpow.pop %v1170
    %v1172 = vmul.f32 %v1169, 1.442695
    %v1173 = vpow.pop %v1172
    %v1174 = vmul.f32 %v1171, %v1080
    %v1175 = vmul.f32 %v1173, %v1081
    %v1176 = vadd.f32 %v1174, %v1162
    %v1177 = vadd.f32 %v1175, %v1163
    %1178 = vset.pattern.permute.xlu0 7
    %1179 = vperm.xlu0 %1178, %v475
    %v1180 = vpop.permute.xlu0 %1179
    %1182 = vset.pattern.permute.xlu0 7
    %1183 = vperm.xlu0 %1182, %v476
    %v1184 = vpop.permute.xlu0 %1183
    %v1186 = vmul.f32 %v1176, %v1180
    %v1187 = vmul.f32 %v1177, %v1184
    %v1188 = vsel %vm193, %v1186, 0.0
    %v1189 = vsel %vm193, %v1187, 0.0
    %v1190 = vadd.f32 %v1188, %v1189
    %v1191 = vrot.slane %v1190, 4
    %v1192 = vadd.f32 %v1190, %v1191
    %v1193 = vrot.slane %v1192, 2
    %v1194 = vadd.f32 %v1192, %v1193
    %v1195 = vrot.slane %v1194, 1
    %v1196 = vadd.f32 %v1194, %v1195
    %1197 = vst.msk [vmem:[#allocation2 + $0x7] sm:$0x1] %vm528, %v1196
    %v1198 = vlaneseq
    %v1199 = vshrl.u32 %v1198, 7
    %v1200 = vsub.s32 7, %v1199
    %v1201 = vrot.slane %v406, %v1200
    %1202 = vset.pattern.permute.xlu0 15
    %1203 = vperm.xlu0 %1202, %v437
    %v1204 = vpop.permute.xlu0 %1203
    %1206 = vset.pattern.permute.xlu0 15
    %1207 = vperm.xlu0 %1206, %v438
    %v1208 = vpop.permute.xlu0 %1207
    %v1210 = vmul.f32 %v1201, %v1204
    %v1211 = vmul.f32 %v1201, %v1208
    %v1212 = vlaneseq
    %v1213 = vshrl.u32 %v1212, 7
    %v1214 = vsub.s32 7, %v1213
    %v1215 = vrot.slane %v404, %v1214
    %v1216 = vmul.f32 %v1215, %v585
    %v1217 = vmul.f32 %v1215, %v590
    %v1218 = vmul.f32 %v1216, 1.442695
    %v1219 = vpow.pop %v1218
    %v1220 = vmul.f32 %v1217, 1.442695
    %v1221 = vpow.pop %v1220
    %v1222 = vmul.f32 %v1219, %v1128
    %v1223 = vmul.f32 %v1221, %v1129
    %v1224 = vadd.f32 %v1222, %v1210
    %v1225 = vadd.f32 %v1223, %v1211
    %1226 = vset.pattern.permute.xlu0 15
    %1227 = vperm.xlu0 %1226, %v475
    %v1228 = vpop.permute.xlu0 %1227
    %1230 = vset.pattern.permute.xlu0 15
    %1231 = vperm.xlu0 %1230, %v476
    %v1232 = vpop.permute.xlu0 %1231
    %v1234 = vmul.f32 %v1224, %v1228
    %v1235 = vmul.f32 %v1225, %v1232
    %v1236 = vsel %vm193, %v1234, 0.0
    %v1237 = vsel %vm193, %v1235, 0.0
    %v1238 = vadd.f32 %v1236, %v1237
    %v1239 = vrot.slane %v1238, 4
    %v1240 = vadd.f32 %v1238, %v1239
    %v1241 = vrot.slane %v1240, 2
    %v1242 = vadd.f32 %v1240, %v1241
    %v1243 = vrot.slane %v1242, 1
    %v1244 = vadd.f32 %v1242, %v1243
    %1245 = vst.msk [vmem:[#allocation2 + $0xf] sm:$0x1] %vm528, %v1244
    %v1246 = vld [vmem:[#allocation2] sm:$0xff]
    %v1247 = vld [vmem:[#allocation2 + $0x8] sm:$0xff]
    %1248 = vrot.lane.b32.xlu0 %v183, 64
    %v1249 = vpop.permute.xlu0 %1248
    %1250 = vrot.lane.b32.xlu0 %v184, 64
    %v1251 = vpop.permute.xlu0 %1250
    %v1254 = vmul.f32 %v1246, %v1249
    %v1255 = vmul.f32 %v1247, %v1251
    %v1256 = vld [vmem:[%s8] sm:$0xff]
    %v1257 = vld [vmem:[%s8 + $0x8] sm:$0xff]
    %v1258 = vld [vmem:[%s8 + $0x10] sm:$0xff]
    %v1259 = vld [vmem:[%s8 + $0x18] sm:$0xff]
    %v1260 = vld [vmem:[%s8 + $0x20] sm:$0xff]
    %v1261 = vld [vmem:[%s8 + $0x28] sm:$0xff]
    %v1262 = vld [vmem:[%s8 + $0x30] sm:$0xff]
    %v1263 = vld [vmem:[%s8 + $0x38] sm:$0xff]
    %v1264 = vld [vmem:[%s9] sm:$0x1]
    %v1266 = vlaneseq
    %v1267 = vshrl.u32 %v1266, 7
    %v1268 = vsub.s32 0, %v1267
    %v1269 = vrot.slane %v1264, %v1268
    %v1272 = vsel %vm193, %v1254, 0
    %v1275 = vsel %vm193, %v1255, 0
    %1277 = vmatprep.subr.mxu0 0.0
    %1278 = vmatpush1.msra.mxu0 %v1256
    %1279 = vmatprep.subr.mxu0 0.0
    %1280 = vmatpush1.msra.mxu0 %v1257
    %1281 = vmatprep.subr.mxu0 0.0
    %1282 = vmatpush1.msra.mxu0 %v1258
    %1283 = vmatprep.subr.mxu0 0.0
    %1284 = vmatpush1.msra.mxu0 %v1259
    %1285 = vmatprep.subr.mxu0 0.0
    %1286 = vmatpush1.msra.mxu0 %v1260
    %1287 = vmatprep.subr.mxu0 0.0
    %1288 = vmatpush1.msra.mxu0 %v1261
    %1289 = vmatprep.subr.mxu0 0.0
    %1290 = vmatpush1.msra.mxu0 %v1262
    %1291 = vmatprep.subr.mxu0 0.0
    %1292 = vmatpush1.msra.mxu0 %v1263
    %1293 = vmatprep.subr.mxu0 0.0
    %1294 = vmatpush1.msra.mxu0 0.0
    %1295 = vmatprep.subr.mxu0 0.0
    %1296 = vmatpush1.msra.mxu0 0.0
    %1297 = vmatprep.subr.mxu0 0.0
    %1298 = vmatpush1.msra.mxu0 0.0
    %1299 = vmatprep.subr.mxu0 0.0
    %1300 = vmatpush1.msra.mxu0 0.0
    %1301 = vmatprep.subr.mxu0 0.0
    %1302 = vmatpush1.msra.mxu0 0.0
    %1303 = vmatprep.subr.mxu0 0.0
    %1304 = vmatpush1.msra.mxu0 0.0
    %1305 = vmatprep.subr.mxu0 0.0
    %1306 = vmatpush1.msra.mxu0 0.0
    %1307 = vmatprep.subr.mxu0 0.0
    %1308 = vmatpush1.msra.mxu0 0.0
    %1309 = vmatprep.subr.mxu0 0.0
    %1310 = vmatpush1.msra.mxu0 0.0
    %1311 = vmatprep.subr.mxu0 0.0
    %1312 = vmatpush1.msra.mxu0 0.0
    %1313 = vmatprep.subr.mxu0 0.0
    %1314 = vmatpush1.msra.mxu0 0.0
    %1315 = vmatprep.subr.mxu0 0.0
    %1316 = vmatpush1.msra.mxu0 0.0
    %1317 = vmatprep.subr.mxu0 0.0
    %1318 = vmatpush1.msra.mxu0 0.0
    %1319 = vmatprep.subr.mxu0 0.0
    %1320 = vmatpush1.msra.mxu0 0.0
    %1321 = vmatprep.subr.mxu0 0.0
    %1322 = vmatpush1.msra.mxu0 0.0
    %1323 = vmatprep.subr.mxu0 0.0
    %1324 = vmatpush1.msra.mxu0 0.0
    %1325 = vmatprep.subr.mxu0 0.0
    %1326 = vmatpush1.msra.mxu0 0.0
    %1327 = vmatprep.subr.mxu0 0.0
    %1328 = vmatpush1.msra.mxu0 0.0
    %1329 = vmatprep.subr.mxu0 0.0
    %1330 = vmatpush1.msra.mxu0 0.0
    %1331 = vmatprep.subr.mxu0 0.0
    %1332 = vmatpush1.msra.mxu0 0.0
    %1333 = vmatprep.subr.mxu0 0.0
    %1334 = vmatpush1.msra.mxu0 0.0
    %1335 = vmatprep.subr.mxu0 0.0
    %1336 = vmatpush1.msra.mxu0 0.0
    %1337 = vmatprep.subr.mxu0 0.0
    %1338 = vmatpush1.msra.mxu0 0.0
    %1339 = vmatprep.subr.mxu0 0.0
    %1340 = vmatpush1.msra.mxu0 0.0
    %1341 = vmatprep.mubr.f32.mxu0 0.0
    %1342 = vmatmul.mubr.f32.gmra.mrb[0].mxu0 %v1272
    %v1343 = vpop.f32.mrb[0].mxu0
    %v1344 = vadd.f32 %v1269, %v1343
    %v1345 = vpop.f32.mrb[0].mxu0
    %1346 = vmatprep.mubr.f32.mxu0 0.0
    %1347 = vmatmul.mubr.f32.gmra.mrb[0].mxu0 %v1275
    %v1348 = vpop.f32.mrb[0].mxu0
    %v1349 = vadd.f32 %v1269, %v1348
    %v1350 = vpop.f32.mrb[0].mxu0
    %1351 = vdwg.mxu0
    %v1352 = vadd.f32 %v1344, %v50
    %v1353 = vadd.f32 %v1349, %v51
    %1354 = vst.msk [vmem:[#allocation6] sm:$0xff] %vm54, %v1352
    %1355 = vst.msk [vmem:[#allocation6 + $0x8] sm:$0xff] %vm54, %v1353
    // Predicated region
    $region46: #{tpu_custom_call.1} parent=1 // pred_check
      _
    $region47: #{tpu_custom_call.1} parent=1 // pred_check_branch
      %1357 = sbr.rel (0) target = $region49
    $region48: #{tpu_custom_call.1} parent=1 // pred_region
      %s1359 = ssub.s32 256, 256
      %1360 = vsyncadd [#allocation5], %s1359
      %s1361 = sshll.u32 [#allocation6], 4
      %s1362 = int_to_ptr.vmem [resolvable:$true] %s1361
      %1367 = dma.vmem_to_hbm [thread:$0]  %s1362, 256, %s10, [#allocation5], 128, 128, 8
    $region49: #{tpu_custom_call.1} parent=1 // pred_fallthru
      _
    // Predicated region
    $region50: #{tpu_custom_call.1} parent=1 // pred_check
      _
    $region51: #{tpu_custom_call.1} parent=1 // pred_check_branch
      %1369 = sbr.rel (0) target = $region53
    $region52: #{tpu_custom_call.1} parent=1 // pred_region
      %1370 = dma.done [#allocation5], 256
    $region53: #{tpu_custom_call.1} parent=1 // pred_fallthru
      _
    %1371 = vsyncpa [#allocation4], 1
    %1372 = vsyncpa [#allocation5], 1

</llo_original>
